<compile_context>
chip_gen: v7x
topology: tpu7x:2x2x1
jax: 0.10.0
libtpu: 0.0.40
codegen_flags: <defaults>
</compile_context>

<pallas_src>
import jax
import jax.numpy as jnp
from jax.experimental import pallas as pl
from jax.experimental.pallas import tpu as pltpu


# ----------------------------------------------------------------------------
# small static helpers
# ----------------------------------------------------------------------------
def _round_up(x, m):
    return ((x + m - 1) // m) * m


def _pick_m_tiling(M, target=1024):
    """Lane tile (multiple of 128) and padded M. Prefers >=2 blocks so the
    grid axis can shard across v7x's two TensorCores."""
    tm = min(target, _round_up(M, 128))
    if _round_up(M, tm) // tm < 2 and tm > 128:
        tm_half = _round_up(tm // 2, 128)
        if _round_up(M, tm_half) // tm_half >= 2:
            tm = tm_half
    return tm, _round_up(M, tm)


def _pad_cols(a, Mp):
    M = a.shape[-1]
    return a if Mp == M else jnp.pad(a, ((0, 0), (0, Mp - M)))


def _w2d(w):
    """[Co, Ci, KH, KW] -> [Co, KH*KW*Ci]; column order (kh, kw, ci)."""
    Co, Ci, KH, KW = w.shape
    return jnp.transpose(w, (0, 2, 3, 1)).reshape(Co, KH * KW * Ci)


def _im2col(x_nchw, k, pad):
    """[B,C,H,W] -> patch matrix [k*k*C, B*H*W] for a stride-1 'same' conv.
    Rows ordered (tap, channel) to match _w2d; columns ordered (b, h, w)."""
    B, C, H, W = x_nchw.shape
    assert 2 * pad == k - 1, "only same-size (stride-1) convs are supported"
    xp = jnp.pad(x_nchw, ((0, 0), (0, 0), (pad, pad), (pad, pad)))
    xp = jnp.transpose(xp, (1, 0, 2, 3))                       # [C, B, Hp, Wp]
    taps = [xp[:, :, kh:kh + H, kw:kw + W].reshape(C, B * H * W)
            for kh in range(k) for kw in range(k)]
    return jnp.concatenate(taps, axis=0)                       # [k*k*C, M]


def _avg_pool2(x_nchw):
    B, C, H, W = x_nchw.shape
    assert H % 2 == 0 and W % 2 == 0, "avg_pool2 expects even spatial dims"
    return x_nchw.reshape(B, C, H // 2, 2, W // 2, 2).mean(axis=(3, 5))


def _upsample2_cols(y, Co, B, Hl, Wl):
    """[Co, B*Hl*Wl] -> nearest x2 -> [Co, B*(2Hl)*(2Wl)] (column order (b,h,w))."""
    y4 = y.reshape(Co, B, Hl, Wl)
    y4 = jnp.repeat(jnp.repeat(y4, 2, axis=2), 2, axis=3)
    return y4.reshape(Co, B * Hl * 2 * Wl * 2)


_COMPILER_PARAMS = pltpu.CompilerParams(
    dimension_semantics=("parallel",),
    vmem_limit_bytes=32 * 1024 * 1024,
)


# ----------------------------------------------------------------------------
# Pallas kernels
# ----------------------------------------------------------------------------
def _low_branch_kernel(w_h2l_ref, w_l2l_ref, w_l2h_ref, p_ph_ref, p_xl_ref,
                       y_lo_ref, y_l2h_ref, s_ref, q_ref):
    """Low-frequency branch pre-BN output (conv_h2l(pool(x_h)) + conv_l2l(x_l)),
    its per-tile BN sum / sumsq partials, and the (low-res) l2h conv output."""
    p_ph = p_ph_ref[...]                                   # [9*Cih, tm]
    p_xl = p_xl_ref[...]                                   # [9*Cil, tm]
    y_lo = (jnp.dot(w_h2l_ref[...], p_ph, preferred_element_type=jnp.float32) +
            jnp.dot(w_l2l_ref[...], p_xl, preferred_element_type=jnp.float32))
    y_lo_ref[...] = y_lo.astype(y_lo_ref.dtype)
    y_l2h_ref[...] = jnp.dot(w_l2h_ref[...], p_xl,
                             preferred_element_type=jnp.float32
                             ).astype(y_l2h_ref.dtype)
    s_ref[...] = jnp.sum(y_lo, axis=1, keepdims=True)[None]          # [1,Col,1]
    q_ref[...] = jnp.sum(y_lo * y_lo, axis=1, keepdims=True)[None]   # [1,Col,1]


def _high_branch_kernel(w_h2h_ref, p_xh_ref, u_ref, y_ref, s_ref, q_ref):
    """High-frequency branch pre-BN output (conv_h2h(x_h) + upsampled l2h),
    plus its per-tile BN sum / sumsq partials."""
    y = jnp.dot(w_h2h_ref[...], p_xh_ref[...],
                preferred_element_type=jnp.float32) + u_ref[...]
    y_ref[...] = y.astype(y_ref.dtype)
    s_ref[...] = jnp.sum(y, axis=1, keepdims=True)[None]
    q_ref[...] = jnp.sum(y * y, axis=1, keepdims=True)[None]


def _affine_kernel(y_ref, scale_ref, shift_ref, o_ref):
    """BatchNorm pass 2: per-channel scale/shift (gamma, beta, mean, var folded)."""
    o_ref[...] = (y_ref[...] * scale_ref[...] + shift_ref[...]).astype(o_ref.dtype)


# ----------------------------------------------------------------------------
# pallas_call wrappers
# ----------------------------------------------------------------------------
def _bn_normalize(y, part_s, part_q, M, gamma, beta, eps, tm):
    """Finish BatchNorm: tiny per-channel glue reduction + tiled affine kernel."""
    C, Mp = y.shape
    mean = jnp.sum(part_s, axis=0)[:, 0] / M
    var = jnp.sum(part_q, axis=0)[:, 0] / M - mean * mean      # biased variance
    scale = gamma.astype(jnp.float32) * jax.lax.rsqrt(var + eps)
    shift = beta.astype(jnp.float32) - mean * scale
    n = Mp // tm
    return pl.pallas_call(
        _affine_kernel,
        out_shape=jax.ShapeDtypeStruct((C, Mp), y.dtype),
        grid=(n,),
        in_specs=[
            pl.BlockSpec((C, tm), lambda i: (0, i)),
            pl.BlockSpec((C, 1), lambda i: (0, 0)),
            pl.BlockSpec((C, 1), lambda i: (0, 0)),
        ],
        out_specs=pl.BlockSpec((C, tm), lambda i: (0, i)),
        compiler_params=_COMPILER_PARAMS,
    )(y, scale[:, None], shift[:, None])


def conv_bn_forward(params, x_h_nchw, x_l_nchw, eps=1e-5):
    w_h2h, w_h2l = params["w_h2h"], params["w_h2l"]
    w_l2h, w_l2l = params["w_l2h"], params["w_l2l"]
    Coh, Cih, k, _ = w_h2h.shape
    Col = w_l2l.shape[0]
    Cil = w_l2l.shape[1]
    pad = (k - 1) // 2
    B, _, H, W = x_h_nchw.shape
    _, _, Hl, Wl = x_l_nchw.shape
    assert (H, W) == (2 * Hl, 2 * Wl)
    M_h, M_l = B * H * W, B * Hl * Wl
    Kh, Kl = k * k * Cih, k * k * Cil

    # ---- glue: patch matrices (channels/taps on sublanes, pixels on lanes) ----
    p_xh = _im2col(x_h_nchw, k, pad)                   # [Kh, M_h]
    p_ph = _im2col(_avg_pool2(x_h_nchw), k, pad)       # [Kh, M_l] (pool fused here)
    p_xl = _im2col(x_l_nchw, k, pad)                   # [Kl, M_l]

    # ---- kernel 1: low branch (summed) + low-res l2h conv + BN partials ----
    tm_l, Mlp = _pick_m_tiling(M_l)
    nl = Mlp // tm_l
    y_lo, y_l2h, s_lo, q_lo = pl.pallas_call(
        _low_branch_kernel,
        out_shape=(jax.ShapeDtypeStruct((Col, Mlp), jnp.float32),
                   jax.ShapeDtypeStruct((Coh, Mlp), jnp.float32),
                   jax.ShapeDtypeStruct((nl, Col, 1), jnp.float32),
                   jax.ShapeDtypeStruct((nl, Col, 1), jnp.float32)),
        grid=(nl,),
        in_specs=[
            pl.BlockSpec((Col, Kh), lambda i: (0, 0)),   # weights: full block, hoisted
            pl.BlockSpec((Col, Kl), lambda i: (0, 0)),
            pl.BlockSpec((Coh, Kl), lambda i: (0, 0)),
            pl.BlockSpec((Kh, tm_l), lambda i: (0, i)),
            pl.BlockSpec((Kl, tm_l), lambda i: (0, i)),
        ],
        out_specs=(pl.BlockSpec((Col, tm_l), lambda i: (0, i)),
                   pl.BlockSpec((Coh, tm_l), lambda i: (0, i)),
                   pl.BlockSpec((1, Col, 1), lambda i: (i, 0, 0)),
                   pl.BlockSpec((1, Col, 1), lambda i: (i, 0, 0))),
        compiler_params=_COMPILER_PARAMS,
    )(_w2d(w_h2l), _w2d(w_l2l), _w2d(w_l2h),
      _pad_cols(p_ph, Mlp), _pad_cols(p_xl, Mlp))

    # ---- glue: nearest-upsample the small Co-channel l2h output to high res ----
    u = _upsample2_cols(y_l2h[:, :M_l], Coh, B, Hl, Wl)          # [Coh, M_h]

    # ---- kernel 2: high branch conv + fused add of upsampled l2h + BN partials ----
    tm_h, Mhp = _pick_m_tiling(M_h)
    nh = Mhp // tm_h
    y_hi, s_hi, q_hi = pl.pallas_call(
        _high_branch_kernel,
        out_shape=(jax.ShapeDtypeStruct((Coh, Mhp), jnp.float32),
                   jax.ShapeDtypeStruct((nh, Coh, 1), jnp.float32),
                   jax.ShapeDtypeStruct((nh, Coh, 1), jnp.float32)),
        grid=(nh,),
        in_specs=[
            pl.BlockSpec((Coh, Kh), lambda i: (0, 0)),
            pl.BlockSpec((Kh, tm_h), lambda i: (0, i)),
            pl.BlockSpec((Coh, tm_h), lambda i: (0, i)),
        ],
        out_specs=(pl.BlockSpec((Coh, tm_h), lambda i: (0, i)),
                   pl.BlockSpec((1, Coh, 1), lambda i: (i, 0, 0)),
                   pl.BlockSpec((1, Coh, 1), lambda i: (i, 0, 0))),
        compiler_params=_COMPILER_PARAMS,
    )(_w2d(w_h2h), _pad_cols(p_xh, Mhp), _pad_cols(u, Mhp))

    # ---- kernels 3/4: BatchNorm normalize (training-mode forward) ----
    # TODO(synk): BatchNorm running_mean/var buffers are not updated (forward
    # output does not depend on them).
    out_h2 = _bn_normalize(y_hi, s_hi, q_hi, M_h,
                           params["gamma_h"], params["beta_h"], eps, tm_h)
    out_l2 = _bn_normalize(y_lo, s_lo, q_lo, M_l,
                           params["gamma_l"], params["beta_l"], eps, tm_l)

    out_h = jnp.transpose(out_h2[:, :M_h].reshape(Coh, B, H, W), (1, 0, 2, 3))
    out_l = jnp.transpose(out_l2[:, :M_l].reshape(Col, B, Hl, Wl), (1, 0, 2, 3))
    return out_h, out_l


# ----------------------------------------------------------------------------
# parameter init (deterministic, synthetic) and pure-JAX reference
# ----------------------------------------------------------------------------
def init_conv_bn_params(key, in_channels, out_channels, kernel_size,
                        alpha_in=0.5, alpha_out=0.5):
    ci_l = int(alpha_in * in_channels)
    ci_h = in_channels - ci_l
    co_l = int(alpha_out * out_channels)
    co_h = out_channels - co_l
    k = kernel_size
    keys = jax.random.split(key, 4)

    def w(kk, co, ci):
        fan_in = ci * k * k
        return jax.random.normal(kk, (co, ci, k, k), jnp.float32) / jnp.sqrt(fan_in)

    return dict(
        w_h2h=w(keys[0], co_h, ci_h),
        w_h2l=w(keys[1], co_l, ci_h),
        w_l2h=w(keys[2], co_h, ci_l),
        w_l2l=w(keys[3], co_l, ci_l),
        gamma_h=jnp.ones((co_h,), jnp.float32),   # BatchNorm2d default init
        beta_h=jnp.zeros((co_h,), jnp.float32),
        gamma_l=jnp.ones((co_l,), jnp.float32),
        beta_l=jnp.zeros((co_l,), jnp.float32),
    )


def _reference_forward(params, x_h, x_l, eps=1e-5):
    k = params["w_h2h"].shape[-1]
    pad = (k - 1) // 2

    def conv(x, w):
        return jax.lax.conv_general_dilated(
            x, w, window_strides=(1, 1), padding=((pad, pad), (pad, pad)),
            dimension_numbers=("NCHW", "OIHW", "NCHW"))

    def bn(x, g, b):
        m = jnp.mean(x, axis=(0, 2, 3), keepdims=True)
        v = jnp.var(x, axis=(0, 2, 3), keepdims=True)
        return ((x - m) * jax.lax.rsqrt(v + eps) * g[None, :, None, None]
                + b[None, :, None, None])

    up = lambda t: jnp.repeat(jnp.repeat(t, 2, axis=2), 2, axis=3)
    x_h2h = conv(x_h, params["w_h2h"])
    x_h2l = conv(_avg_pool2(x_h), params["w_h2l"])
    x_l2h = up(conv(x_l, params["w_l2h"]))
    x_l2l = conv(x_l, params["w_l2l"])
    return (bn(x_l2h + x_h2h, params["gamma_h"], params["beta_h"]),
            bn(x_h2l + x_l2l, params["gamma_l"], params["beta_l"]))


if __name__ == "__main__":
    key = jax.random.PRNGKey(0)
    k_xh, k_xl, k_p = jax.random.split(key, 3)

    B, Cin, Cout, H, W, K = 2, 8, 8, 16, 16, 3
    # OctaveConv tuple input: high-freq half and low-freq half (alpha_in=0.5).
    x_h = jax.random.normal(k_xh, (B, Cin // 2, H, W), jnp.float32)
    x_l = jax.random.normal(k_xl, (B, Cin // 2, H // 2, W // 2), jnp.float32)
    params = init_conv_bn_params(k_p, Cin, Cout, K)

    fwd = jax.jit(conv_bn_forward)
    out_h, out_l = fwd(params, x_h, x_l)
    jax.block_until_ready((out_h, out_l))

    assert out_h.shape == (B, Cout // 2, H, W)
    assert out_l.shape == (B, Cout // 2, H // 2, W // 2)
    assert bool(jnp.all(jnp.isfinite(out_h))) and bool(jnp.all(jnp.isfinite(out_l)))

    # Sanity check against a pure-JAX reference (loose tolerance: TPU f32
    # matmul / conv default precisions differ between the MXU kernel and XLA).
    ref_h, ref_l = _reference_forward(params, x_h, x_l)
    err_h = float(jnp.max(jnp.abs(out_h - ref_h)))
    err_l = float(jnp.max(jnp.abs(out_l - ref_l)))
    assert err_h < 5e-2 and err_l < 5e-2, (err_h, err_l)

    print("KERNEL_OK")
</pallas_src>

<mosaic_0001>
module attributes {stable_mosaic.version = 11 : i64} {
  func.func @_low_branch_kernel(%arg0: i32, %arg1: memref<4x36xf32, #tpu.memory_space<vmem>>, %arg2: memref<4x36xf32, #tpu.memory_space<vmem>>, %arg3: memref<4x36xf32, #tpu.memory_space<vmem>>, %arg4: memref<36x128xf32, #tpu.memory_space<vmem>>, %arg5: memref<36x128xf32, #tpu.memory_space<vmem>>, %arg6: memref<4x128xf32, #tpu.memory_space<vmem>>, %arg7: memref<4x128xf32, #tpu.memory_space<vmem>>, %arg8: memref<1x4x1xf32, #tpu.memory_space<vmem>>, %arg9: memref<1x4x1xf32, #tpu.memory_space<vmem>>) attributes {dimension_semantics = [#tpu.dimension_semantics<parallel>], iteration_bounds = array<i64: 1>, scalar_prefetch = 0 : i64, scratch_operands = 0 : i64, tpu.core_type = #tpu.core_type<tc>, window_params = [{pipeline_mode = #tpu.pipeline_mode<synchronous>, transform_indices = @transform_0, window_bounds = array<i64: 4, 36>}, {pipeline_mode = #tpu.pipeline_mode<synchronous>, transform_indices = @transform_1, window_bounds = array<i64: 4, 36>}, {pipeline_mode = #tpu.pipeline_mode<synchronous>, transform_indices = @transform_2, window_bounds = array<i64: 4, 36>}, {transform_indices = @transform_3, window_bounds = array<i64: 36, 128>}, {transform_indices = @transform_4, window_bounds = array<i64: 36, 128>}, {transform_indices = @transform_5, window_bounds = array<i64: 4, 128>}, {transform_indices = @transform_6, window_bounds = array<i64: 4, 128>}, {transform_indices = @transform_7, window_bounds = array<i64: 1, 4, 1>}, {transform_indices = @transform_8, window_bounds = array<i64: 1, 4, 1>}]} {
    %c0 = arith.constant 0 : index
    %c0_0 = arith.constant 0 : index
    %0 = vector.load %arg4[%c0, %c0_0] : memref<36x128xf32, #tpu.memory_space<vmem>>, vector<36x128xf32>
    %c0_1 = arith.constant 0 : index
    %c0_2 = arith.constant 0 : index
    %1 = vector.load %arg5[%c0_1, %c0_2] : memref<36x128xf32, #tpu.memory_space<vmem>>, vector<36x128xf32>
    %c0_3 = arith.constant 0 : index
    %c0_4 = arith.constant 0 : index
    %2 = vector.load %arg1[%c0_3, %c0_4] : memref<4x36xf32, #tpu.memory_space<vmem>>, vector<4x36xf32>
    %cst = arith.constant dense<0.000000e+00> : vector<4x128xf32>
    %3 = tpu.matmul %2, %0, %cst {dimension_numbers = #tpu.dot_dimension_numbers<[1], [0], [0], [1], [0, 0, 1, 1], [], []>} : vector<4x36xf32>, vector<36x128xf32>, vector<4x128xf32> -> vector<4x128xf32>
    %c0_5 = arith.constant 0 : index
    %c0_6 = arith.constant 0 : index
    %4 = vector.load %arg2[%c0_5, %c0_6] : memref<4x36xf32, #tpu.memory_space<vmem>>, vector<4x36xf32>
    %cst_7 = arith.constant dense<0.000000e+00> : vector<4x128xf32>
    %5 = tpu.matmul %4, %1, %cst_7 {dimension_numbers = #tpu.dot_dimension_numbers<[1], [0], [0], [1], [0, 0, 1, 1], [], []>} : vector<4x36xf32>, vector<36x128xf32>, vector<4x128xf32> -> vector<4x128xf32>
    %6 = arith.addf %3, %5 : vector<4x128xf32>
    %c0_8 = arith.constant 0 : index
    %c0_9 = arith.constant 0 : index
    %7 = vector.load %arg6[%c0_8, %c0_9] : memref<4x128xf32, #tpu.memory_space<vmem>>, vector<4x128xf32>
    tpu.vector_store %arg6[%c0_8, %c0_9], %6 {strides = array<i32>} : memref<4x128xf32, #tpu.memory_space<vmem>>, vector<4x128xf32>,
    %c0_10 = arith.constant 0 : index
    %c0_11 = arith.constant 0 : index
    %8 = vector.load %arg3[%c0_10, %c0_11] : memref<4x36xf32, #tpu.memory_space<vmem>>, vector<4x36xf32>
    %cst_12 = arith.constant dense<0.000000e+00> : vector<4x128xf32>
    %9 = tpu.matmul %8, %1, %cst_12 {dimension_numbers = #tpu.dot_dimension_numbers<[1], [0], [0], [1], [0, 0, 1, 1], [], []>} : vector<4x36xf32>, vector<36x128xf32>, vector<4x128xf32> -> vector<4x128xf32>
    %c0_13 = arith.constant 0 : index
    %c0_14 = arith.constant 0 : index
    %10 = vector.load %arg7[%c0_13, %c0_14] : memref<4x128xf32, #tpu.memory_space<vmem>>, vector<4x128xf32>
    tpu.vector_store %arg7[%c0_13, %c0_14], %9 {strides = array<i32>} : memref<4x128xf32, #tpu.memory_space<vmem>>, vector<4x128xf32>,
    %cst_15 = arith.constant dense<0.000000e+00> : vector<4xf32>
    %11 = vector.multi_reduction <add>, %6, %cst_15 [1] : vector<4x128xf32> to vector<4xf32>
    %12 = vector.shape_cast %11 : vector<4xf32> to vector<4x1xf32>
    %13 = vector.shape_cast %12 : vector<4x1xf32> to vector<1x4x1xf32>
    %c0_16 = arith.constant 0 : index
    %c0_17 = arith.constant 0 : index
    %c0_18 = arith.constant 0 : index
    %14 = vector.load %arg8[%c0_16, %c0_17, %c0_18] : memref<1x4x1xf32, #tpu.memory_space<vmem>>, vector<1x4x1xf32>
    tpu.vector_store %arg8[%c0_16, %c0_17, %c0_18], %13 {strides = array<i32>} : memref<1x4x1xf32, #tpu.memory_space<vmem>>, vector<1x4x1xf32>,
    %15 = arith.mulf %6, %6 : vector<4x128xf32>
    %cst_19 = arith.constant dense<0.000000e+00> : vector<4xf32>
    %16 = vector.multi_reduction <add>, %15, %cst_19 [1] : vector<4x128xf32> to vector<4xf32>
    %17 = vector.shape_cast %16 : vector<4xf32> to vector<4x1xf32>
    %18 = vector.shape_cast %17 : vector<4x1xf32> to vector<1x4x1xf32>
    %c0_20 = arith.constant 0 : index
    %c0_21 = arith.constant 0 : index
    %c0_22 = arith.constant 0 : index
    %19 = vector.load %arg9[%c0_20, %c0_21, %c0_22] : memref<1x4x1xf32, #tpu.memory_space<vmem>>, vector<1x4x1xf32>
    tpu.vector_store %arg9[%c0_20, %c0_21, %c0_22], %18 {strides = array<i32>} : memref<1x4x1xf32, #tpu.memory_space<vmem>>, vector<1x4x1xf32>,
    return
  }
  func.func @transform_0(%arg0: i32) -> (i32, i32) {
    %c0_i32 = arith.constant 0 : i32
    %c0_i32_0 = arith.constant 0 : i32
    %c0_i32_1 = arith.constant 0 : i32
    return %c0_i32, %c0_i32_0 : i32, i32
  }
  func.func @transform_1(%arg0: i32) -> (i32, i32) {
    %c0_i32 = arith.constant 0 : i32
    %c0_i32_0 = arith.constant 0 : i32
    %c0_i32_1 = arith.constant 0 : i32
    return %c0_i32, %c0_i32_0 : i32, i32
  }
  func.func @transform_2(%arg0: i32) -> (i32, i32) {
    %c0_i32 = arith.constant 0 : i32
    %c0_i32_0 = arith.constant 0 : i32
    %c0_i32_1 = arith.constant 0 : i32
    return %c0_i32, %c0_i32_0 : i32, i32
  }
  func.func @transform_3(%arg0: i32) -> (i32, i32) {
    %c0_i32 = arith.constant 0 : i32
    %c0_i32_0 = arith.constant 0 : i32
    return %c0_i32, %arg0 : i32, i32
  }
  func.func @transform_4(%arg0: i32) -> (i32, i32) {
    %c0_i32 = arith.constant 0 : i32
    %c0_i32_0 = arith.constant 0 : i32
    return %c0_i32, %arg0 : i32, i32
  }
  func.func @transform_5(%arg0: i32) -> (i32, i32) {
    %c0_i32 = arith.constant 0 : i32
    %c0_i32_0 = arith.constant 0 : i32
    return %c0_i32, %arg0 : i32, i32
  }
  func.func @transform_6(%arg0: i32) -> (i32, i32) {
    %c0_i32 = arith.constant 0 : i32
    %c0_i32_0 = arith.constant 0 : i32
    return %c0_i32, %arg0 : i32, i32
  }
  func.func @transform_7(%arg0: i32) -> (i32, i32, i32) {
    %c0_i32 = arith.constant 0 : i32
    %c0_i32_0 = arith.constant 0 : i32
    %c0_i32_1 = arith.constant 0 : i32
    return %arg0, %c0_i32, %c0_i32_0 : i32, i32, i32
  }
  func.func @transform_8(%arg0: i32) -> (i32, i32, i32) {
    %c0_i32 = arith.constant 0 : i32
    %c0_i32_0 = arith.constant 0 : i32
    %c0_i32_1 = arith.constant 0 : i32
    return %arg0, %c0_i32, %c0_i32_0 : i32, i32, i32
  }
}

module attributes {stable_mosaic.version = 11 : i64} {
  func.func @_affine_kernel(%arg0: i32, %arg1: memref<4x128xf32, #tpu.memory_space<vmem>>, %arg2: memref<4x1xf32, #tpu.memory_space<vmem>>, %arg3: memref<4x1xf32, #tpu.memory_space<vmem>>, %arg4: memref<4x128xf32, #tpu.memory_space<vmem>>) attributes {dimension_semantics = [#tpu.dimension_semantics<parallel>], iteration_bounds = array<i64: 1>, scalar_prefetch = 0 : i64, scratch_operands = 0 : i64, tpu.core_type = #tpu.core_type<tc>, window_params = [{transform_indices = @transform_0, window_bounds = array<i64: 4, 128>}, {pipeline_mode = #tpu.pipeline_mode<synchronous>, transform_indices = @transform_1, window_bounds = array<i64: 4, 1>}, {pipeline_mode = #tpu.pipeline_mode<synchronous>, transform_indices = @transform_2, window_bounds = array<i64: 4, 1>}, {transform_indices = @transform_3, window_bounds = array<i64: 4, 128>}]} {
    %c0 = arith.constant 0 : index
    %c0_0 = arith.constant 0 : index
    %0 = vector.load %arg1[%c0, %c0_0] : memref<4x128xf32, #tpu.memory_space<vmem>>, vector<4x128xf32>
    %c0_1 = arith.constant 0 : index
    %c0_2 = arith.constant 0 : index
    %1 = vector.load %arg2[%c0_1, %c0_2] : memref<4x1xf32, #tpu.memory_space<vmem>>, vector<4x1xf32>
    %2 = vector.broadcast %1 : vector<4x1xf32> to vector<4x128xf32>
    %3 = arith.mulf %0, %2 : vector<4x128xf32>
    %c0_3 = arith.constant 0 : index
    %c0_4 = arith.constant 0 : index
    %4 = vector.load %arg3[%c0_3, %c0_4] : memref<4x1xf32, #tpu.memory_space<vmem>>, vector<4x1xf32>
    %5 = vector.broadcast %4 : vector<4x1xf32> to vector<4x128xf32>
    %6 = arith.addf %3, %5 : vector<4x128xf32>
    %c0_5 = arith.constant 0 : index
    %c0_6 = arith.constant 0 : index
    %7 = vector.load %arg4[%c0_5, %c0_6] : memref<4x128xf32, #tpu.memory_space<vmem>>, vector<4x128xf32>
    tpu.vector_store %arg4[%c0_5, %c0_6], %6 {strides = array<i32>} : memref<4x128xf32, #tpu.memory_space<vmem>>, vector<4x128xf32>,
    return
  }
  func.func @transform_0(%arg0: i32) -> (i32, i32) {
    %c0_i32 = arith.constant 0 : i32
    %c0_i32_0 = arith.constant 0 : i32
    return %c0_i32, %arg0 : i32, i32
  }
  func.func @transform_1(%arg0: i32) -> (i32, i32) {
    %c0_i32 = arith.constant 0 : i32
    %c0_i32_0 = arith.constant 0 : i32
    %c0_i32_1 = arith.constant 0 : i32
    return %c0_i32, %c0_i32_0 : i32, i32
  }
  func.func @transform_2(%arg0: i32) -> (i32, i32) {
    %c0_i32 = arith.constant 0 : i32
    %c0_i32_0 = arith.constant 0 : i32
    %c0_i32_1 = arith.constant 0 : i32
    return %c0_i32, %c0_i32_0 : i32, i32
  }
  func.func @transform_3(%arg0: i32) -> (i32, i32) {
    %c0_i32 = arith.constant 0 : i32
    %c0_i32_0 = arith.constant 0 : i32
    return %c0_i32, %arg0 : i32, i32
  }
}

module attributes {stable_mosaic.version = 11 : i64} {
  func.func @_high_branch_kernel(%arg0: i32, %arg1: memref<4x36xf32, #tpu.memory_space<vmem>>, %arg2: memref<36x256xf32, #tpu.memory_space<vmem>>, %arg3: memref<4x256xf32, #tpu.memory_space<vmem>>, %arg4: memref<4x256xf32, #tpu.memory_space<vmem>>, %arg5: memref<1x4x1xf32, #tpu.memory_space<vmem>>, %arg6: memref<1x4x1xf32, #tpu.memory_space<vmem>>) attributes {dimension_semantics = [#tpu.dimension_semantics<parallel>], iteration_bounds = array<i64: 2>, scalar_prefetch = 0 : i64, scratch_operands = 0 : i64, tpu.core_type = #tpu.core_type<tc>, window_params = [{pipeline_mode = #tpu.pipeline_mode<synchronous>, transform_indices = @transform_0, window_bounds = array<i64: 4, 36>}, {transform_indices = @transform_1, window_bounds = array<i64: 36, 256>}, {transform_indices = @transform_2, window_bounds = array<i64: 4, 256>}, {transform_indices = @transform_3, window_bounds = array<i64: 4, 256>}, {transform_indices = @transform_4, window_bounds = array<i64: 1, 4, 1>}, {transform_indices = @transform_5, window_bounds = array<i64: 1, 4, 1>}]} {
    %c0 = arith.constant 0 : index
    %c0_0 = arith.constant 0 : index
    %0 = vector.load %arg1[%c0, %c0_0] : memref<4x36xf32, #tpu.memory_space<vmem>>, vector<4x36xf32>
    %c0_1 = arith.constant 0 : index
    %c0_2 = arith.constant 0 : index
    %1 = vector.load %arg2[%c0_1, %c0_2] : memref<36x256xf32, #tpu.memory_space<vmem>>, vector<36x256xf32>
    %cst = arith.constant dense<0.000000e+00> : vector<4x256xf32>
    %2 = tpu.matmul %0, %1, %cst {dimension_numbers = #tpu.dot_dimension_numbers<[1], [0], [0], [1], [0, 0, 1, 1], [], []>} : vector<4x36xf32>, vector<36x256xf32>, vector<4x256xf32> -> vector<4x256xf32>
    %c0_3 = arith.constant 0 : index
    %c0_4 = arith.constant 0 : index
    %3 = vector.load %arg3[%c0_3, %c0_4] : memref<4x256xf32, #tpu.memory_space<vmem>>, vector<4x256xf32>
    %4 = arith.addf %2, %3 : vector<4x256xf32>
    %c0_5 = arith.constant 0 : index
    %c0_6 = arith.constant 0 : index
    %5 = vector.load %arg4[%c0_5, %c0_6] : memref<4x256xf32, #tpu.memory_space<vmem>>, vector<4x256xf32>
    tpu.vector_store %arg4[%c0_5, %c0_6], %4 {strides = array<i32>} : memref<4x256xf32, #tpu.memory_space<vmem>>, vector<4x256xf32>,
    %cst_7 = arith.constant dense<0.000000e+00> : vector<4xf32>
    %6 = vector.multi_reduction <add>, %4, %cst_7 [1] : vector<4x256xf32> to vector<4xf32>
    %7 = vector.shape_cast %6 : vector<4xf32> to vector<4x1xf32>
    %8 = vector.shape_cast %7 : vector<4x1xf32> to vector<1x4x1xf32>
    %c0_8 = arith.constant 0 : index
    %c0_9 = arith.constant 0 : index
    %c0_10 = arith.constant 0 : index
    %9 = vector.load %arg5[%c0_8, %c0_9, %c0_10] : memref<1x4x1xf32, #tpu.memory_space<vmem>>, vector<1x4x1xf32>
    tpu.vector_store %arg5[%c0_8, %c0_9, %c0_10], %8 {strides = array<i32>} : memref<1x4x1xf32, #tpu.memory_space<vmem>>, vector<1x4x1xf32>,
    %10 = arith.mulf %4, %4 : vector<4x256xf32>
    %cst_11 = arith.constant dense<0.000000e+00> : vector<4xf32>
    %11 = vector.multi_reduction <add>, %10, %cst_11 [1] : vector<4x256xf32> to vector<4xf32>
    %12 = vector.shape_cast %11 : vector<4xf32> to vector<4x1xf32>
    %13 = vector.shape_cast %12 : vector<4x1xf32> to vector<1x4x1xf32>
    %c0_12 = arith.constant 0 : index
    %c0_13 = arith.constant 0 : index
    %c0_14 = arith.constant 0 : index
    %14 = vector.load %arg6[%c0_12, %c0_13, %c0_14] : memref<1x4x1xf32, #tpu.memory_space<vmem>>, vector<1x4x1xf32>
    tpu.vector_store %arg6[%c0_12, %c0_13, %c0_14], %13 {strides = array<i32>} : memref<1x4x1xf32, #tpu.memory_space<vmem>>, vector<1x4x1xf32>,
    return
  }
  func.func @transform_0(%arg0: i32) -> (i32, i32) {
    %c0_i32 = arith.constant 0 : i32
    %c0_i32_0 = arith.constant 0 : i32
    %c0_i32_1 = arith.constant 0 : i32
    return %c0_i32, %c0_i32_0 : i32, i32
  }
  func.func @transform_1(%arg0: i32) -> (i32, i32) {
    %c0_i32 = arith.constant 0 : i32
    %c0_i32_0 = arith.constant 0 : i32
    return %c0_i32, %arg0 : i32, i32
  }
  func.func @transform_2(%arg0: i32) -> (i32, i32) {
    %c0_i32 = arith.constant 0 : i32
    %c0_i32_0 = arith.constant 0 : i32
    return %c0_i32, %arg0 : i32, i32
  }
  func.func @transform_3(%arg0: i32) -> (i32, i32) {
    %c0_i32 = arith.constant 0 : i32
    %c0_i32_0 = arith.constant 0 : i32
    return %c0_i32, %arg0 : i32, i32
  }
  func.func @transform_4(%arg0: i32) -> (i32, i32, i32) {
    %c0_i32 = arith.constant 0 : i32
    %c0_i32_0 = arith.constant 0 : i32
    %c0_i32_1 = arith.constant 0 : i32
    return %arg0, %c0_i32, %c0_i32_0 : i32, i32, i32
  }
  func.func @transform_5(%arg0: i32) -> (i32, i32, i32) {
    %c0_i32 = arith.constant 0 : i32
    %c0_i32_0 = arith.constant 0 : i32
    %c0_i32_1 = arith.constant 0 : i32
    return %arg0, %c0_i32, %c0_i32_0 : i32, i32, i32
  }
}

module attributes {stable_mosaic.version = 11 : i64} {
  func.func @_affine_kernel(%arg0: i32, %arg1: memref<4x256xf32, #tpu.memory_space<vmem>>, %arg2: memref<4x1xf32, #tpu.memory_space<vmem>>, %arg3: memref<4x1xf32, #tpu.memory_space<vmem>>, %arg4: memref<4x256xf32, #tpu.memory_space<vmem>>) attributes {dimension_semantics = [#tpu.dimension_semantics<parallel>], iteration_bounds = array<i64: 2>, scalar_prefetch = 0 : i64, scratch_operands = 0 : i64, tpu.core_type = #tpu.core_type<tc>, window_params = [{transform_indices = @transform_0, window_bounds = array<i64: 4, 256>}, {pipeline_mode = #tpu.pipeline_mode<synchronous>, transform_indices = @transform_1, window_bounds = array<i64: 4, 1>}, {pipeline_mode = #tpu.pipeline_mode<synchronous>, transform_indices = @transform_2, window_bounds = array<i64: 4, 1>}, {transform_indices = @transform_3, window_bounds = array<i64: 4, 256>}]} {
    %c0 = arith.constant 0 : index
    %c0_0 = arith.constant 0 : index
    %0 = vector.load %arg1[%c0, %c0_0] : memref<4x256xf32, #tpu.memory_space<vmem>>, vector<4x256xf32>
    %c0_1 = arith.constant 0 : index
    %c0_2 = arith.constant 0 : index
    %1 = vector.load %arg2[%c0_1, %c0_2] : memref<4x1xf32, #tpu.memory_space<vmem>>, vector<4x1xf32>
    %2 = vector.broadcast %1 : vector<4x1xf32> to vector<4x256xf32>
    %3 = arith.mulf %0, %2 : vector<4x256xf32>
    %c0_3 = arith.constant 0 : index
    %c0_4 = arith.constant 0 : index
    %4 = vector.load %arg3[%c0_3, %c0_4] : memref<4x1xf32, #tpu.memory_space<vmem>>, vector<4x1xf32>
    %5 = vector.broadcast %4 : vector<4x1xf32> to vector<4x256xf32>
    %6 = arith.addf %3, %5 : vector<4x256xf32>
    %c0_5 = arith.constant 0 : index
    %c0_6 = arith.constant 0 : index
    %7 = vector.load %arg4[%c0_5, %c0_6] : memref<4x256xf32, #tpu.memory_space<vmem>>, vector<4x256xf32>
    tpu.vector_store %arg4[%c0_5, %c0_6], %6 {strides = array<i32>} : memref<4x256xf32, #tpu.memory_space<vmem>>, vector<4x256xf32>,
    return
  }
  func.func @transform_0(%arg0: i32) -> (i32, i32) {
    %c0_i32 = arith.constant 0 : i32
    %c0_i32_0 = arith.constant 0 : i32
    return %c0_i32, %arg0 : i32, i32
  }
  func.func @transform_1(%arg0: i32) -> (i32, i32) {
    %c0_i32 = arith.constant 0 : i32
    %c0_i32_0 = arith.constant 0 : i32
    %c0_i32_1 = arith.constant 0 : i32
    return %c0_i32, %c0_i32_0 : i32, i32
  }
  func.func @transform_2(%arg0: i32) -> (i32, i32) {
    %c0_i32 = arith.constant 0 : i32
    %c0_i32_0 = arith.constant 0 : i32
    %c0_i32_1 = arith.constant 0 : i32
    return %c0_i32, %c0_i32_0 : i32, i32
  }
  func.func @transform_3(%arg0: i32) -> (i32, i32) {
    %c0_i32 = arith.constant 0 : i32
    %c0_i32_0 = arith.constant 0 : i32
    return %c0_i32, %arg0 : i32, i32
  }
}

</mosaic_0001>

<llo_original>
// kernel: conv_bn_forward.7
$region0: #{conv_bn_forward.7}
  #allocation0 [shape = 'u32[]', space=smem, size = 0x4, offset = 0x4, fixed_abs, tag = 'smem constant byte address 0x4 - core index']
  #allocation1 [shape = 'u32[144,128]{1,0:T(1,128)}', space=vmem, size = 0x12000, scoped, tag = 'internal scratch']
  %s0 = inlined_call_operand.vmem [shape: f32[4,128], index: 0, kind: input, shape index: {}]
  %s1 = inlined_call_operand.vmem [shape: f32[4,1], index: 1, kind: input, shape index: {}]
  %s2 = inlined_call_operand.vmem [shape: f32[4,1], index: 2, kind: input, shape index: {}]
  %s3 = inlined_call_operand.vmem [shape: f32[4,128], index: 3, kind: output, shape index: {}]
  %s4 = sld [smem:[#allocation0]]
  $region22: #{conv_bn_forward.7} parent=0
    _
  %s6 = ssub.s32 1, %s4
  %s7 = scalar_select 0, %s6, %s4
  // Predicated region
  $region2: #{conv_bn_forward.7} parent=0 // pred_check
    _
  $region3: #{conv_bn_forward.7} parent=0 // pred_check_branch
    %9 = sbr.rel (0) target = $region5
  $region4: #{conv_bn_forward.7} parent=0 // pred_region
    _
  $region5: #{conv_bn_forward.7} parent=0 // pred_fallthru
    _
  // Predicated region
  $region6: #{conv_bn_forward.7} parent=0 // pred_check
    _
  $region7: #{conv_bn_forward.7} parent=0 // pred_check_branch
    %11 = sbr.rel (0) target = $region9
  $region8: #{conv_bn_forward.7} parent=0 // pred_region
    _
  $region9: #{conv_bn_forward.7} parent=0 // pred_fallthru
    _
  // Predicated region
  $region10: #{conv_bn_forward.7} parent=0 // pred_check
    _
  $region11: #{conv_bn_forward.7} parent=0 // pred_check_branch
    %13 = sbr.rel (0) target = $region13
  $region12: #{conv_bn_forward.7} parent=0 // pred_region
    _
  $region13: #{conv_bn_forward.7} parent=0 // pred_fallthru
    _
  %v14 = vld [vmem:[%s0] sm:$0xf]
  %v15 = vld [vmem:[%s1] sm:$0xf]
  %17 = vset.pattern.permute.xlu0 0
  %18 = vperm.xlu0 %17, %v15
  %v19 = vpop.permute.xlu0 %18
  %v21 = vmul.f32 %v14, %v19
  %v22 = vld [vmem:[%s2] sm:$0xf]
  %24 = vset.pattern.permute.xlu0 0
  %25 = vperm.xlu0 %24, %v22
  %v26 = vpop.permute.xlu0 %25
  %v28 = vadd.f32 %v21, %v26
  %29 = vst [vmem:[%s3] sm:$0xf] %v28
  // Predicated region
  $region14: #{conv_bn_forward.7} parent=0 // pred_check
    _
  $region15: #{conv_bn_forward.7} parent=0 // pred_check_branch
    %31 = sbr.rel (0) target = $region17
  $region16: #{conv_bn_forward.7} parent=0 // pred_region
    _
  $region17: #{conv_bn_forward.7} parent=0 // pred_fallthru
    _
  // Predicated region
  $region18: #{conv_bn_forward.7} parent=0 // pred_check
    _
  $region19: #{conv_bn_forward.7} parent=0 // pred_check_branch
    %33 = sbr.rel (0) target = $region21
  $region20: #{conv_bn_forward.7} parent=0 // pred_region
    _
  $region21: #{conv_bn_forward.7} parent=0 // pred_fallthru
    _

// kernel: conv_bn_forward.4
$region0: #{conv_bn_forward.4}
  #allocation0 [shape = 'u32[]', space=smem, size = 0x4, offset = 0x4, fixed_abs, tag = 'smem constant byte address 0x4 - core index']
  #allocation1 [shape = 'u32[144,128]{1,0:T(1,128)}', space=vmem, size = 0x12000, scoped, tag = 'internal scratch']
  %s0 = inlined_call_operand.vmem [shape: f32[4,36], index: 0, kind: input, shape index: {}]
  %s1 = inlined_call_operand.vmem [shape: f32[4,36], index: 1, kind: input, shape index: {}]
  %s2 = inlined_call_operand.vmem [shape: f32[4,36], index: 2, kind: input, shape index: {}]
  %s3 = inlined_call_operand.vmem [shape: f32[36,128], index: 3, kind: input, shape index: {}]
  %s4 = inlined_call_operand.vmem [shape: f32[36,128], index: 4, kind: input, shape index: {}]
  %s5 = inlined_call_operand.vmem [shape: f32[4,128], index: 5, kind: output, shape index: {0}]
  %s6 = inlined_call_operand.vmem [shape: f32[4,128], index: 6, kind: output, shape index: {1}]
  %s7 = inlined_call_operand.vmem [shape: f32[1,4,1], index: 7, kind: output, shape index: {2}]
  %s8 = inlined_call_operand.vmem [shape: f32[1,4,1], index: 8, kind: output, shape index: {3}]
  %9 = xla_tuple %s5, %s6, %s7, %s8
  %s10 = sld [smem:[#allocation0]]
  $region54: #{conv_bn_forward.4} parent=0
    _
  %s12 = ssub.s32 1, %s10
  %s13 = scalar_select 0, %s12, %s10
  // Predicated region
  $region2: #{conv_bn_forward.4} parent=0 // pred_check
    _
  $region3: #{conv_bn_forward.4} parent=0 // pred_check_branch
    %15 = sbr.rel (0) target = $region5
  $region4: #{conv_bn_forward.4} parent=0 // pred_region
    _
  $region5: #{conv_bn_forward.4} parent=0 // pred_fallthru
    _
  // Predicated region
  $region6: #{conv_bn_forward.4} parent=0 // pred_check
    _
  $region7: #{conv_bn_forward.4} parent=0 // pred_check_branch
    %17 = sbr.rel (0) target = $region9
  $region8: #{conv_bn_forward.4} parent=0 // pred_region
    _
  $region9: #{conv_bn_forward.4} parent=0 // pred_fallthru
    _
  // Predicated region
  $region10: #{conv_bn_forward.4} parent=0 // pred_check
    _
  $region11: #{conv_bn_forward.4} parent=0 // pred_check_branch
    %19 = sbr.rel (0) target = $region13
  $region12: #{conv_bn_forward.4} parent=0 // pred_region
    _
  $region13: #{conv_bn_forward.4} parent=0 // pred_fallthru
    _
  // Predicated region
  $region14: #{conv_bn_forward.4} parent=0 // pred_check
    _
  $region15: #{conv_bn_forward.4} parent=0 // pred_check_branch
    %21 = sbr.rel (0) target = $region17
  $region16: #{conv_bn_forward.4} parent=0 // pred_region
    _
  $region17: #{conv_bn_forward.4} parent=0 // pred_fallthru
    _
  // Predicated region
  $region18: #{conv_bn_forward.4} parent=0 // pred_check
    _
  $region19: #{conv_bn_forward.4} parent=0 // pred_check_branch
    %23 = sbr.rel (0) target = $region21
  $region20: #{conv_bn_forward.4} parent=0 // pred_region
    _
  $region21: #{conv_bn_forward.4} parent=0 // pred_fallthru
    _
  %v24 = vld [vmem:[%s3] sm:$0xff]
  %v25 = vld [vmem:[%s3 + $0x8] sm:$0xff]
  %v26 = vld [vmem:[%s3 + $0x10] sm:$0xff]
  %v27 = vld [vmem:[%s3 + $0x18] sm:$0xff]
  %v28 = vld [vmem:[%s3 + $0x20] sm:$0xf]
  %v29 = vld [vmem:[%s4] sm:$0xff]
  %v30 = vld [vmem:[%s4 + $0x8] sm:$0xff]
  %v31 = vld [vmem:[%s4 + $0x10] sm:$0xff]
  %v32 = vld [vmem:[%s4 + $0x18] sm:$0xff]
  %v33 = vld [vmem:[%s4 + $0x20] sm:$0xf]
  %v34 = vld [vmem:[%s0] sm:$0xf]
  %v35 = vld [vmem:[%s1] sm:$0xf]
  %vm36 = vcmask 293888
  %v38 = vsel %vm36, %v35, 0
  %vm40 = vcmask 1043456
  %v42 = vsel %vm40, %v33, 0
  %44 = vmatprep.subr.mxu0 0.0
  %45 = vmatpush1.msra.mxu0 %v29
  %46 = vmatprep.subr.mxu0 0.0
  %47 = vmatpush1.msra.mxu0 %v30
  %48 = vmatprep.subr.mxu0 0.0
  %49 = vmatpush1.msra.mxu0 %v31
  %50 = vmatprep.subr.mxu0 0.0
  %51 = vmatpush1.msra.mxu0 %v32
  %52 = vmatprep.subr.mxu0 0.0
  %53 = vmatpush1.msra.mxu0 %v42
  %54 = vmatprep.subr.mxu0 0.0
  %55 = vmatpush1.msra.mxu0 0.0
  %56 = vmatprep.subr.mxu0 0.0
  %57 = vmatpush1.msra.mxu0 0.0
  %58 = vmatprep.subr.mxu0 0.0
  %59 = vmatpush1.msra.mxu0 0.0
  %60 = vmatprep.subr.mxu0 0.0
  %61 = vmatpush1.msra.mxu0 0.0
  %62 = vmatprep.subr.mxu0 0.0
  %63 = vmatpush1.msra.mxu0 0.0
  %64 = vmatprep.subr.mxu0 0.0
  %65 = vmatpush1.msra.mxu0 0.0
  %66 = vmatprep.subr.mxu0 0.0
  %67 = vmatpush1.msra.mxu0 0.0
  %68 = vmatprep.subr.mxu0 0.0
  %69 = vmatpush1.msra.mxu0 0.0
  %70 = vmatprep.subr.mxu0 0.0
  %71 = vmatpush1.msra.mxu0 0.0
  %72 = vmatprep.subr.mxu0 0.0
  %73 = vmatpush1.msra.mxu0 0.0
  %74 = vmatprep.subr.mxu0 0.0
  %75 = vmatpush1.msra.mxu0 0.0
  %76 = vmatprep.subr.mxu0 0.0
  %77 = vmatpush1.msra.mxu0 0.0
  %78 = vmatprep.subr.mxu0 0.0
  %79 = vmatpush1.msra.mxu0 0.0
  %80 = vmatprep.subr.mxu0 0.0
  %81 = vmatpush1.msra.mxu0 0.0
  %82 = vmatprep.subr.mxu0 0.0
  %83 = vmatpush1.msra.mxu0 0.0
  %84 = vmatprep.subr.mxu0 0.0
  %85 = vmatpush1.msra.mxu0 0.0
  %86 = vmatprep.subr.mxu0 0.0
  %87 = vmatpush1.msra.mxu0 0.0
  %88 = vmatprep.subr.mxu0 0.0
  %89 = vmatpush1.msra.mxu0 0.0
  %90 = vmatprep.subr.mxu0 0.0
  %91 = vmatpush1.msra.mxu0 0.0
  %92 = vmatprep.subr.mxu0 0.0
  %93 = vmatpush1.msra.mxu0 0.0
  %94 = vmatprep.subr.mxu0 0.0
  %95 = vmatpush1.msra.mxu0 0.0
  %96 = vmatprep.subr.mxu0 0.0
  %97 = vmatpush1.msra.mxu0 0.0
  %98 = vmatprep.subr.mxu0 0.0
  %99 = vmatpush1.msra.mxu0 0.0
  %100 = vmatprep.subr.mxu0 0.0
  %101 = vmatpush1.msra.mxu0 0.0
  %102 = vmatprep.subr.mxu0 0.0
  %103 = vmatpush1.msra.mxu0 0.0
  %104 = vmatprep.subr.mxu0 0.0
  %105 = vmatpush1.msra.mxu0 0.0
  %106 = vmatprep.subr.mxu0 0.0
  %107 = vmatpush1.msra.mxu0 0.0
  %108 = vmatprep.mubr.f32.mxu0 0.0
  %109 = vmatmul.mubr.f32.gmra.mrb[0].mxu0 %v38
  %v110 = vpop.f32.mrb[0].mxu0
  %v111 = vadd.f32 0.0, %v110
  %v112 = vpop.f32.mrb[0].mxu0
  %113 = vdwg.mxu0
  %v115 = vsel %vm36, %v34, 0
  %v118 = vsel %vm40, %v28, 0
  %120 = vmatprep.subr.mxu0 0.0
  %121 = vmatpush1.msra.mxu0 %v24
  %122 = vmatprep.subr.mxu0 0.0
  %123 = vmatpush1.msra.mxu0 %v25
  %124 = vmatprep.subr.mxu0 0.0
  %125 = vmatpush1.msra.mxu0 %v26
  %126 = vmatprep.subr.mxu0 0.0
  %127 = vmatpush1.msra.mxu0 %v27
  %128 = vmatprep.subr.mxu0 0.0
  %129 = vmatpush1.msra.mxu0 %v118
  %130 = vmatprep.subr.mxu0 0.0
  %131 = vmatpush1.msra.mxu0 0.0
  %132 = vmatprep.subr.mxu0 0.0
  %133 = vmatpush1.msra.mxu0 0.0
  %134 = vmatprep.subr.mxu0 0.0
  %135 = vmatpush1.msra.mxu0 0.0
  %136 = vmatprep.subr.mxu0 0.0
  %137 = vmatpush1.msra.mxu0 0.0
  %138 = vmatprep.subr.mxu0 0.0
  %139 = vmatpush1.msra.mxu0 0.0
  %140 = vmatprep.subr.mxu0 0.0
  %141 = vmatpush1.msra.mxu0 0.0
  %142 = vmatprep.subr.mxu0 0.0
  %143 = vmatpush1.msra.mxu0 0.0
  %144 = vmatprep.subr.mxu0 0.0
  %145 = vmatpush1.msra.mxu0 0.0
  %146 = vmatprep.subr.mxu0 0.0
  %147 = vmatpush1.msra.mxu0 0.0
  %148 = vmatprep.subr.mxu0 0.0
  %149 = vmatpush1.msra.mxu0 0.0
  %150 = vmatprep.subr.mxu0 0.0
  %151 = vmatpush1.msra.mxu0 0.0
  %152 = vmatprep.subr.mxu0 0.0
  %153 = vmatpush1.msra.mxu0 0.0
  %154 = vmatprep.subr.mxu0 0.0
  %155 = vmatpush1.msra.mxu0 0.0
  %156 = vmatprep.subr.mxu0 0.0
  %157 = vmatpush1.msra.mxu0 0.0
  %158 = vmatprep.subr.mxu0 0.0
  %159 = vmatpush1.msra.mxu0 0.0
  %160 = vmatprep.subr.mxu0 0.0
  %161 = vmatpush1.msra.mxu0 0.0
  %162 = vmatprep.subr.mxu0 0.0
  %163 = vmatpush1.msra.mxu0 0.0
  %164 = vmatprep.subr.mxu0 0.0
  %165 = vmatpush1.msra.mxu0 0.0
  %166 = vmatprep.subr.mxu0 0.0
  %167 = vmatpush1.msra.mxu0 0.0
  %168 = vmatprep.subr.mxu0 0.0
  %169 = vmatpush1.msra.mxu0 0.0
  %170 = vmatprep.subr.mxu0 0.0
  %171 = vmatpush1.msra.mxu0 0.0
  %172 = vmatprep.subr.mxu0 0.0
  %173 = vmatpush1.msra.mxu0 0.0
  %174 = vmatprep.subr.mxu0 0.0
  %175 = vmatpush1.msra.mxu0 0.0
  %176 = vmatprep.subr.mxu0 0.0
  %177 = vmatpush1.msra.mxu0 0.0
  %178 = vmatprep.subr.mxu0 0.0
  %179 = vmatpush1.msra.mxu0 0.0
  %180 = vmatprep.subr.mxu0 0.0
  %181 = vmatpush1.msra.mxu0 0.0
  %182 = vmatprep.subr.mxu0 0.0
  %183 = vmatpush1.msra.mxu0 0.0
  %184 = vmatprep.mubr.f32.mxu0 0.0
  %185 = vmatmul.mubr.f32.gmra.mrb[0].mxu0 %v115
  %v186 = vpop.f32.mrb[0].mxu0
  %v187 = vadd.f32 %v111, %v186
  %v188 = vpop.f32.mrb[0].mxu0
  %189 = vdwg.mxu0
  %190 = vst [vmem:[%s5] sm:$0xf] %v187
  %v191 = vld [vmem:[%s2] sm:$0xf]
  %v193 = vsel %vm36, %v191, 0
  %195 = vmatprep.subr.mxu0 0.0
  %196 = vmatpush1.msra.mxu0 %v29
  %197 = vmatprep.subr.mxu0 0.0
  %198 = vmatpush1.msra.mxu0 %v30
  %199 = vmatprep.subr.mxu0 0.0
  %200 = vmatpush1.msra.mxu0 %v31
  %201 = vmatprep.subr.mxu0 0.0
  %202 = vmatpush1.msra.mxu0 %v32
  %203 = vmatprep.subr.mxu0 0.0
  %204 = vmatpush1.msra.mxu0 %v42
  %205 = vmatprep.subr.mxu0 0.0
  %206 = vmatpush1.msra.mxu0 0.0
  %207 = vmatprep.subr.mxu0 0.0
  %208 = vmatpush1.msra.mxu0 0.0
  %209 = vmatprep.subr.mxu0 0.0
  %210 = vmatpush1.msra.mxu0 0.0
  %211 = vmatprep.subr.mxu0 0.0
  %212 = vmatpush1.msra.mxu0 0.0
  %213 = vmatprep.subr.mxu0 0.0
  %214 = vmatpush1.msra.mxu0 0.0
  %215 = vmatprep.subr.mxu0 0.0
  %216 = vmatpush1.msra.mxu0 0.0
  %217 = vmatprep.subr.mxu0 0.0
  %218 = vmatpush1.msra.mxu0 0.0
  %219 = vmatprep.subr.mxu0 0.0
  %220 = vmatpush1.msra.mxu0 0.0
  %221 = vmatprep.subr.mxu0 0.0
  %222 = vmatpush1.msra.mxu0 0.0
  %223 = vmatprep.subr.mxu0 0.0
  %224 = vmatpush1.msra.mxu0 0.0
  %225 = vmatprep.subr.mxu0 0.0
  %226 = vmatpush1.msra.mxu0 0.0
  %227 = vmatprep.subr.mxu0 0.0
  %228 = vmatpush1.msra.mxu0 0.0
  %229 = vmatprep.subr.mxu0 0.0
  %230 = vmatpush1.msra.mxu0 0.0
  %231 = vmatprep.subr.mxu0 0.0
  %232 = vmatpush1.msra.mxu0 0.0
  %233 = vmatprep.subr.mxu0 0.0
  %234 = vmatpush1.msra.mxu0 0.0
  %235 = vmatprep.subr.mxu0 0.0
  %236 = vmatpush1.msra.mxu0 0.0
  %237 = vmatprep.subr.mxu0 0.0
  %238 = vmatpush1.msra.mxu0 0.0
  %239 = vmatprep.subr.mxu0 0.0
  %240 = vmatpush1.msra.mxu0 0.0
  %241 = vmatprep.subr.mxu0 0.0
  %242 = vmatpush1.msra.mxu0 0.0
  %243 = vmatprep.subr.mxu0 0.0
  %244 = vmatpush1.msra.mxu0 0.0
  %245 = vmatprep.subr.mxu0 0.0
  %246 = vmatpush1.msra.mxu0 0.0
  %247 = vmatprep.subr.mxu0 0.0
  %248 = vmatpush1.msra.mxu0 0.0
  %249 = vmatprep.subr.mxu0 0.0
  %250 = vmatpush1.msra.mxu0 0.0
  %251 = vmatprep.subr.mxu0 0.0
  %252 = vmatpush1.msra.mxu0 0.0
  %253 = vmatprep.subr.mxu0 0.0
  %254 = vmatpush1.msra.mxu0 0.0
  %255 = vmatprep.subr.mxu0 0.0
  %256 = vmatpush1.msra.mxu0 0.0
  %257 = vmatprep.subr.mxu0 0.0
  %258 = vmatpush1.msra.mxu0 0.0
  %259 = vmatprep.mubr.f32.mxu0 0.0
  %260 = vmatmul.mubr.f32.gmra.mrb[0].mxu0 %v193
  %v261 = vpop.f32.mrb[0].mxu0
  %v262 = vadd.f32 0.0, %v261
  %v263 = vpop.f32.mrb[0].mxu0
  %264 = vdwg.mxu0
  %265 = vst [vmem:[%s6] sm:$0xf] %v262
  %v266 = vsel %vm40, %v187, 0.0
  %267 = vadd.xlane.f32.xlu0 %v266
  %v268 = vpop.xlane.xlu0 %267
  %vm269 = vcmask 3072
  %270 = vst.msk [vmem:[%s7] sm:$0xf] %vm269, %v268
  %v271 = vmul.f32 %v187, %v187
  %v272 = vsel %vm40, %v271, 0.0
  %273 = vadd.xlane.f32.xlu0 %v272
  %v274 = vpop.xlane.xlu0 %273
  %275 = vst.msk [vmem:[%s8] sm:$0xf] %vm269, %v274
  // Predicated region
  $region22: #{conv_bn_forward.4} parent=0 // pred_check
    _
  $region23: #{conv_bn_forward.4} parent=0 // pred_check_branch
    %277 = sbr.rel (0) target = $region25
  $region24: #{conv_bn_forward.4} parent=0 // pred_region
    _
  $region25: #{conv_bn_forward.4} parent=0 // pred_fallthru
    _
  // Predicated region
  $region26: #{conv_bn_forward.4} parent=0 // pred_check
    _
  $region27: #{conv_bn_forward.4} parent=0 // pred_check_branch
    %279 = sbr.rel (0) target = $region29
  $region28: #{conv_bn_forward.4} parent=0 // pred_region
    _
  $region29: #{conv_bn_forward.4} parent=0 // pred_fallthru
    _
  // Predicated region
  $region30: #{conv_bn_forward.4} parent=0 // pred_check
    _
  $region31: #{conv_bn_forward.4} parent=0 // pred_check_branch
    %281 = sbr.rel (0) target = $region33
  $region32: #{conv_bn_forward.4} parent=0 // pred_region
    _
  $region33: #{conv_bn_forward.4} parent=0 // pred_fallthru
    _
  // Predicated region
  $region34: #{conv_bn_forward.4} parent=0 // pred_check
    _
  $region35: #{conv_bn_forward.4} parent=0 // pred_check_branch
    %283 = sbr.rel (0) target = $region37
  $region36: #{conv_bn_forward.4} parent=0 // pred_region
    _
  $region37: #{conv_bn_forward.4} parent=0 // pred_fallthru
    _
  // Predicated region
  $region38: #{conv_bn_forward.4} parent=0 // pred_check
    _
  $region39: #{conv_bn_forward.4} parent=0 // pred_check_branch
    %285 = sbr.rel (0) target = $region41
  $region40: #{conv_bn_forward.4} parent=0 // pred_region
    _
  $region41: #{conv_bn_forward.4} parent=0 // pred_fallthru
    _
  // Predicated region
  $region42: #{conv_bn_forward.4} parent=0 // pred_check
    _
  $region43: #{conv_bn_forward.4} parent=0 // pred_check_branch
    %287 = sbr.rel (0) target = $region45
  $region44: #{conv_bn_forward.4} parent=0 // pred_region
    _
  $region45: #{conv_bn_forward.4} parent=0 // pred_fallthru
    _
  // Predicated region
  $region46: #{conv_bn_forward.4} parent=0 // pred_check
    _
  $region47: #{conv_bn_forward.4} parent=0 // pred_check_branch
    %289 = sbr.rel (0) target = $region49
  $region48: #{conv_bn_forward.4} parent=0 // pred_region
    _
  $region49: #{conv_bn_forward.4} parent=0 // pred_fallthru
    _
  // Predicated region
  $region50: #{conv_bn_forward.4} parent=0 // pred_check
    _
  $region51: #{conv_bn_forward.4} parent=0 // pred_check_branch
    %291 = sbr.rel (0) target = $region53
  $region52: #{conv_bn_forward.4} parent=0 // pred_region
    _
  $region53: #{conv_bn_forward.4} parent=0 // pred_fallthru
    _

// kernel: conv_bn_forward.6
$region0: #{conv_bn_forward.6}
  #allocation0 [shape = 'u32[]', space=smem, size = 0x4, offset = 0x4, fixed_abs, tag = 'smem constant byte address 0x4 - core index']
  #allocation1 [shape = 'u32[144,128]{1,0:T(1,128)}', space=vmem, size = 0x12000, scoped, tag = 'internal scratch']
  %s0 = inlined_call_operand.vmem [shape: f32[4,512], index: 0, kind: input, shape index: {}]
  %s1 = inlined_call_operand.vmem [shape: f32[4,1], index: 1, kind: input, shape index: {}]
  %s2 = inlined_call_operand.vmem [shape: f32[4,1], index: 2, kind: input, shape index: {}]
  %s3 = inlined_call_operand.vmem [shape: f32[4,512], index: 3, kind: output, shape index: {}]
  %s4 = sld [smem:[#allocation0]]
  $region45: #{conv_bn_forward.6} parent=0
    _
  %s6 = ssub.s32 1, %s4
  %s7 = scalar_select 0, %s6, %s4
  loop: start=0, step=1, limit=4
  $region2: #{conv_bn_forward.6} parent=0 // loop_pre_header
    _
  $region3: #{conv_bn_forward.6} parent=0 // loop_header
    %s9 = sphi 0, %s13
    %p10 = scmp.ge.s32.totalorder %s9, 4
    %s19 = sphi 0, %s21
    %s22 = sphi 0, %s19
    %s23 = sphi 0, %s22
    %s39 = sphi 0, %s23
    %s43 = sphi 0, %s43
    %s45 = sphi 0, %s43
    %s46 = sphi 0, %s45
    %s60 = sphi 0, %s46
    %s64 = sphi 0, %s64
    %s66 = sphi 0, %s64
    %s67 = sphi 0, %s66
    %s81 = sphi 0, %s67
    %s87 = sphi 0, %s89
    %s90 = sphi 0, %s87
    %s91 = sphi 0, %s90
    %s107 = sphi 0, %s91
  $region4: #{conv_bn_forward.6} parent=0 // loop_header_branch
    %12 = sbr.rel (%p10) target = $region8
  $region5: #{conv_bn_forward.6} parent=0 // loop_body
    %s14 = ssub.s32 %s9, 1
    %s15 = ssub.s32 %s9, 2
    %s16 = sadd.s32 %s9, 1
    %s17 = ssub.s32 %s9, %s16
    %p18 = scmp.eq.s32.totalorder %s17, 0
    %s20 = sadd.s32 %s19, 1
    %s21 = scalar_select %p18, %s19, %s20
    %p24 = pneg %p18
    %p25 = scmp.eq.s32.totalorder %s9, 1
    %p26 = por %p24, %p25
    %p27 = scmp.ne.s32.totalorder %s19, %s22
    %p28 = scmp.eq.s32.totalorder %s9, 0
    %p29 = por %p27, %p28
    %p30 = scmp.ne.s32.totalorder %s19, %s22
    %p31 = scmp.eq.s32.totalorder %s14, 1
    %p32 = por %p30, %p31
    %p33 = scmp.ne.s32.totalorder %s22, %s23
    %p34 = scmp.eq.s32.totalorder %s14, 0
    %p35 = por %p33, %p34
    %p36 = scmp.ne.s32.totalorder %s22, %s23
    %p37 = scmp.eq.s32.totalorder %s15, 1
    %p38 = por %p36, %p37
    %p40 = scmp.ne.s32.totalorder %s23, %s39
    %p41 = scmp.eq.s32.totalorder %s15, 0
    %p42 = por %p40, %p41
    %s44 = sadd.s32 %s43, 1
    %p47 = scmp.eq.s32.totalorder %s9, 1
    %p48 = scmp.ne.s32.totalorder %s43, %s45
    %p49 = scmp.eq.s32.totalorder %s9, 0
    %p50 = por %p48, %p49
    %p51 = scmp.ne.s32.totalorder %s43, %s45
    %p52 = scmp.eq.s32.totalorder %s14, 1
    %p53 = por %p51, %p52
    %p54 = scmp.ne.s32.totalorder %s45, %s46
    %p55 = scmp.eq.s32.totalorder %s14, 0
    %p56 = por %p54, %p55
    %p57 = scmp.ne.s32.totalorder %s45, %s46
    %p58 = scmp.eq.s32.totalorder %s15, 1
    %p59 = por %p57, %p58
    %p61 = scmp.ne.s32.totalorder %s46, %s60
    %p62 = scmp.eq.s32.totalorder %s15, 0
    %p63 = por %p61, %p62
    %s65 = sadd.s32 %s64, 1
    %p68 = scmp.eq.s32.totalorder %s9, 1
    %p69 = scmp.ne.s32.totalorder %s64, %s66
    %p70 = scmp.eq.s32.totalorder %s9, 0
    %p71 = por %p69, %p70
    %p72 = scmp.ne.s32.totalorder %s64, %s66
    %p73 = scmp.eq.s32.totalorder %s14, 1
    %p74 = por %p72, %p73
    %p75 = scmp.ne.s32.totalorder %s66, %s67
    %p76 = scmp.eq.s32.totalorder %s14, 0
    %p77 = por %p75, %p76
    %p78 = scmp.ne.s32.totalorder %s66, %s67
    %p79 = scmp.eq.s32.totalorder %s15, 1
    %p80 = por %p78, %p79
    %p82 = scmp.ne.s32.totalorder %s67, %s81
    %p83 = scmp.eq.s32.totalorder %s15, 0
    %p84 = por %p82, %p83
    %s85 = ssub.s32 %s9, %s16
    %p86 = scmp.eq.s32.totalorder %s85, 0
    %s88 = sadd.s32 %s87, 1
    %s89 = scalar_select %p86, %s87, %s88
    %p92 = pneg %p86
    %p93 = scmp.eq.s32.totalorder %s9, 1
    %p94 = por %p92, %p93
    %p95 = scmp.ne.s32.totalorder %s87, %s90
    %p96 = scmp.eq.s32.totalorder %s9, 0
    %p97 = por %p95, %p96
    %p98 = scmp.ne.s32.totalorder %s87, %s90
    %p99 = scmp.eq.s32.totalorder %s14, 1
    %p100 = por %p98, %p99
    %p101 = scmp.ne.s32.totalorder %s90, %s91
    %p102 = scmp.eq.s32.totalorder %s14, 0
    %p103 = por %p101, %p102
    %p104 = scmp.ne.s32.totalorder %s90, %s91
    %p105 = scmp.eq.s32.totalorder %s15, 1
    %p106 = por %p104, %p105
    %p108 = scmp.ne.s32.totalorder %s91, %s107
    %p109 = scmp.eq.s32.totalorder %s15, 0
    %p110 = por %p108, %p109
    %p111 = scmp.le.s32.totalorder 1, %s9
    %p112 = scmp.lt.s32.totalorder %s9, 3
    %p113 = pnand %p111, %p112
    %p114 = pneg %p113
    // Predicated region
    $region9: #{conv_bn_forward.6} parent=5 // pred_check
      _
    $region10: #{conv_bn_forward.6} parent=5 // pred_check_branch
      %116 = sbr.rel (%p113) target = $region12
    $region11: #{conv_bn_forward.6} parent=5 // pred_region
      %s117 = ssub.s32 %s9, 1
      // Predicated region
      $region13: #{conv_bn_forward.6} parent=11 // pred_check
        %p118 = pneg %p56
      $region14: #{conv_bn_forward.6} parent=11 // pred_check_branch
        %120 = sbr.rel (%p118) target = $region16
      $region15: #{conv_bn_forward.6} parent=11 // pred_region
        _
      $region16: #{conv_bn_forward.6} parent=11 // pred_fallthru
        _
      // Predicated region
      $region17: #{conv_bn_forward.6} parent=11 // pred_check
        %p121 = pneg %p77
      $region18: #{conv_bn_forward.6} parent=11 // pred_check_branch
        %123 = sbr.rel (%p121) target = $region20
      $region19: #{conv_bn_forward.6} parent=11 // pred_region
        _
      $region20: #{conv_bn_forward.6} parent=11 // pred_fallthru
        _
    $region12: #{conv_bn_forward.6} parent=5 // pred_fallthru
      _
    %p124 = scmp.lt.s32.totalorder %s9, 2
    // Predicated region
    $region21: #{conv_bn_forward.6} parent=5 // pred_check
      %p125 = pneg %p124
    $region22: #{conv_bn_forward.6} parent=5 // pred_check_branch
      %127 = sbr.rel (%p125) target = $region24
    $region23: #{conv_bn_forward.6} parent=5 // pred_region
      // Predicated region
      $region25: #{conv_bn_forward.6} parent=23 // pred_check
        %p128 = pneg %p29
      $region26: #{conv_bn_forward.6} parent=23 // pred_check_branch
        %130 = sbr.rel (%p128) target = $region28
      $region27: #{conv_bn_forward.6} parent=23 // pred_region
        %s131 = smul.u32 2, %s9
        %p132 = scmp.lt.s32.totalorder %s131, 3
        %s133 = scalar_select %p132, %s131, 3
        %s134 = smul.addr %s133, 4
        %s135 = scalar_lea.vmem %s0, %s134
        %s136 = smul.u32 2, %s9
      $region28: #{conv_bn_forward.6} parent=23 // pred_fallthru
        _
    $region24: #{conv_bn_forward.6} parent=5 // pred_fallthru
      _
    %p137 = scmp.le.s32.totalorder 1, %s9
    %p138 = scmp.lt.s32.totalorder %s9, 3
    %p139 = pnand %p137, %p138
    %p140 = pneg %p139
    // Predicated region
    $region29: #{conv_bn_forward.6} parent=5 // pred_check
      _
    $region30: #{conv_bn_forward.6} parent=5 // pred_check_branch
      %142 = sbr.rel (%p139) target = $region32
    $region31: #{conv_bn_forward.6} parent=5 // pred_region
      %s143 = ssub.s32 %s9, 1
      %s144 = smul.u32 2, %s14
      %p145 = scmp.lt.s32.totalorder %s144, 3
      %s146 = scalar_select %p145, %s144, 3
      %s147 = smul.addr %s146, 4
      %s148 = scalar_lea.vmem %s0, %s147
      %p149 = pneg %p35
      %p150 = pneg %p32
      %p151 = pneg %p56
      %p152 = pneg %p53
      %p153 = pneg %p77
      %p154 = pneg %p74
      %p155 = pneg %p103
      %p156 = pneg %p100
      %s157 = smul.u32 2, %s14
      %p158 = scmp.lt.s32.totalorder %s157, 3
      %s159 = scalar_select %p158, %s157, 3
      %s160 = smul.addr %s159, 4
      %s161 = scalar_lea.vmem %s3, %s160
      %s162 = smul.u32 2, %s14
      %p163 = scmp.lt.s32.totalorder %s162, 3
      %s164 = scalar_select %p163, %s162, 3
      %s165 = smul.addr %s164, 4
      %s166 = scalar_lea.vmem %s0, %s165
      %s167 = smul.u32 2, %s14
      %s168 = smul.u32 2, %s14
      %p169 = scmp.lt.s32.totalorder %s168, 3
      %s170 = scalar_select %p169, %s168, 3
      %s171 = smul.addr %s170, 4
      %s172 = scalar_lea.vmem %s3, %s171
      %s173 = smul.u32 2, %s14
      %v174 = vld [vmem:[%s166] sm:$0xff]
      %v175 = vld [vmem:[%s1] sm:$0xf]
      %177 = vset.pattern.permute.xlu0 0
      %178 = vperm.xlu0 %177, %v175
      %v179 = vpop.permute.xlu0 %178
      %v181 = vunpack.c.l.s4 839922192
      %v182 = vunpack.c.0.s8 %v181
      %v183 = vlaneseq
      %v184 = vshrl.u32 %v183, 7
      %v185 = vsub.s32 %v182, %v184
      %v186 = vrot.slane %v179, %v185
      %v188 = vmul.f32 %v174, %v186
      %v189 = vld [vmem:[%s2] sm:$0xf]
      %191 = vset.pattern.permute.xlu0 0
      %192 = vperm.xlu0 %191, %v189
      %v193 = vpop.permute.xlu0 %192
      %v195 = vunpack.c.l.s4 839922192
      %v196 = vunpack.c.0.s8 %v195
      %v197 = vlaneseq
      %v198 = vshrl.u32 %v197, 7
      %v199 = vsub.s32 %v196, %v198
      %v200 = vrot.slane %v193, %v199
      %v202 = vadd.f32 %v188, %v200
      %203 = vst [vmem:[%s172] sm:$0xff] %v202
      %s204 = smul.u32 2, %s14
      %p205 = scmp.lt.s32.totalorder %s204, 3
      %s206 = scalar_select %p205, %s204, 3
      %s207 = smul.addr %s206, 4
      %s208 = scalar_lea.vmem %s3, %s207
      // Predicated region
      $region33: #{conv_bn_forward.6} parent=31 // pred_check
        %p209 = pneg %p100
      $region34: #{conv_bn_forward.6} parent=31 // pred_check_branch
        %211 = sbr.rel (%p209) target = $region36
      $region35: #{conv_bn_forward.6} parent=31 // pred_region
        %s212 = smul.u32 2, %s14
      $region36: #{conv_bn_forward.6} parent=31 // pred_fallthru
        _
    $region32: #{conv_bn_forward.6} parent=5 // pred_fallthru
      _
    %p213 = scmp.le.s32.totalorder 2, %s9
    // Predicated region
    $region37: #{conv_bn_forward.6} parent=5 // pred_check
      %p214 = pneg %p213
    $region38: #{conv_bn_forward.6} parent=5 // pred_check_branch
      %216 = sbr.rel (%p214) target = $region40
    $region39: #{conv_bn_forward.6} parent=5 // pred_region
      %s217 = ssub.s32 %s9, 2
      // Predicated region
      $region41: #{conv_bn_forward.6} parent=39 // pred_check
        %p218 = pneg %p106
      $region42: #{conv_bn_forward.6} parent=39 // pred_check_branch
        %220 = sbr.rel (%p218) target = $region44
      $region43: #{conv_bn_forward.6} parent=39 // pred_region
        %s221 = smul.u32 2, %s15
        %p222 = scmp.lt.s32.totalorder %s221, 3
        %s223 = scalar_select %p222, %s221, 3
        %s224 = smul.addr %s223, 4
        %s225 = scalar_lea.vmem %s3, %s224
      $region44: #{conv_bn_forward.6} parent=39 // pred_fallthru
        _
    $region40: #{conv_bn_forward.6} parent=5 // pred_fallthru
      _
  $region6: #{conv_bn_forward.6} parent=0 // loop_footer
    %s13 = sadd.s32 1, %s9
  $region7: #{conv_bn_forward.6} parent=0 // loop_footer_branch
    %8 = sbr.rel target = $region3
  $region8: #{conv_bn_forward.6} parent=0 // loop_exit
    _

// kernel: conv_bn_forward.5
$region0: #{conv_bn_forward.5}
  #allocation0 [shape = 'u32[]', space=smem, size = 0x4, offset = 0x4, fixed_abs, tag = 'smem constant byte address 0x4 - core index']
  #allocation1 [shape = 'u32[144,128]{1,0:T(1,128)}', space=vmem, size = 0x12000, scoped, tag = 'internal scratch']
  %s0 = inlined_call_operand.vmem [shape: f32[4,36], index: 0, kind: input, shape index: {}]
  %s1 = inlined_call_operand.vmem [shape: f32[36,512], index: 1, kind: input, shape index: {}]
  %s2 = inlined_call_operand.vmem [shape: f32[4,512], index: 2, kind: input, shape index: {}]
  %s3 = inlined_call_operand.vmem [shape: f32[4,512], index: 3, kind: output, shape index: {0}]
  %s4 = inlined_call_operand.vmem [shape: f32[2,4,1], index: 4, kind: output, shape index: {1}]
  %s5 = inlined_call_operand.vmem [shape: f32[2,4,1], index: 5, kind: output, shape index: {2}]
  %6 = xla_tuple %s3, %s4, %s5
  %s7 = sld [smem:[#allocation0]]
  $region84: #{conv_bn_forward.5} parent=0
    _
  %s9 = ssub.s32 1, %s7
  %s10 = scalar_select 0, %s9, %s7
  $region1: #{conv_bn_forward.5} parent=0
    #allocation2 [shape = 'u8[81920]{0}', space=vmem, size = 0x14000, scoped, tag = 'input window, operand 1']
    loop: start=0, step=1, limit=4
    $region2: #{conv_bn_forward.5} parent=1 // loop_pre_header
      _
    $region3: #{conv_bn_forward.5} parent=1 // loop_header
      %s12 = sphi 0, %s16
      %p13 = scmp.ge.s32.totalorder %s12, 4
      %s20 = sphi 0, %s20
      %s22 = sphi 0, %s20
      %s23 = sphi 0, %s22
      %s37 = sphi 0, %s23
      %s43 = sphi 0, %s45
      %s46 = sphi 0, %s43
      %s47 = sphi 0, %s46
      %s63 = sphi 0, %s47
      %s69 = sphi 0, %s71
      %s72 = sphi 0, %s69
      %s73 = sphi 0, %s72
      %s89 = sphi 0, %s73
      %s95 = sphi 0, %s97
      %s98 = sphi 0, %s95
      %s99 = sphi 0, %s98
      %s115 = sphi 0, %s99
      %s121 = sphi 0, %s123
      %s124 = sphi 0, %s121
      %s125 = sphi 0, %s124
      %s141 = sphi 0, %s125
      %s147 = sphi 0, %s149
      %s150 = sphi 0, %s147
      %s151 = sphi 0, %s150
      %s167 = sphi 0, %s151
    $region4: #{conv_bn_forward.5} parent=1 // loop_header_branch
      %15 = sbr.rel (%p13) target = $region8
    $region5: #{conv_bn_forward.5} parent=1 // loop_body
      %s17 = ssub.s32 %s12, 1
      %s18 = ssub.s32 %s12, 2
      %s19 = sadd.s32 %s12, 1
      %s21 = sadd.s32 %s20, 1
      %p24 = scmp.eq.s32.totalorder %s12, 1
      %p25 = scmp.ne.s32.totalorder %s20, %s22
      %p26 = scmp.eq.s32.totalorder %s12, 0
      %p27 = por %p25, %p26
      %p28 = scmp.ne.s32.totalorder %s20, %s22
      %p29 = scmp.eq.s32.totalorder %s17, 1
      %p30 = por %p28, %p29
      %p31 = scmp.ne.s32.totalorder %s22, %s23
      %p32 = scmp.eq.s32.totalorder %s17, 0
      %p33 = por %p31, %p32
      %p34 = scmp.ne.s32.totalorder %s22, %s23
      %p35 = scmp.eq.s32.totalorder %s18, 1
      %p36 = por %p34, %p35
      %p38 = scmp.ne.s32.totalorder %s23, %s37
      %p39 = scmp.eq.s32.totalorder %s18, 0
      %p40 = por %p38, %p39
      %s41 = ssub.s32 %s12, %s19
      %p42 = scmp.eq.s32.totalorder %s41, 0
      %s44 = sadd.s32 %s43, 1
      %s45 = scalar_select %p42, %s43, %s44
      %p48 = pneg %p42
      %p49 = scmp.eq.s32.totalorder %s12, 1
      %p50 = por %p48, %p49
      %p51 = scmp.ne.s32.totalorder %s43, %s46
      %p52 = scmp.eq.s32.totalorder %s12, 0
      %p53 = por %p51, %p52
      %p54 = scmp.ne.s32.totalorder %s43, %s46
      %p55 = scmp.eq.s32.totalorder %s17, 1
      %p56 = por %p54, %p55
      %p57 = scmp.ne.s32.totalorder %s46, %s47
      %p58 = scmp.eq.s32.totalorder %s17, 0
      %p59 = por %p57, %p58
      %p60 = scmp.ne.s32.totalorder %s46, %s47
      %p61 = scmp.eq.s32.totalorder %s18, 1
      %p62 = por %p60, %p61
      %p64 = scmp.ne.s32.totalorder %s47, %s63
      %p65 = scmp.eq.s32.totalorder %s18, 0
      %p66 = por %p64, %p65
      %s67 = ssub.s32 %s12, %s19
      %p68 = scmp.eq.s32.totalorder %s67, 0
      %s70 = sadd.s32 %s69, 1
      %s71 = scalar_select %p68, %s69, %s70
      %p74 = pneg %p68
      %p75 = scmp.eq.s32.totalorder %s12, 1
      %p76 = por %p74, %p75
      %p77 = scmp.ne.s32.totalorder %s69, %s72
      %p78 = scmp.eq.s32.totalorder %s12, 0
      %p79 = por %p77, %p78
      %p80 = scmp.ne.s32.totalorder %s69, %s72
      %p81 = scmp.eq.s32.totalorder %s17, 1
      %p82 = por %p80, %p81
      %p83 = scmp.ne.s32.totalorder %s72, %s73
      %p84 = scmp.eq.s32.totalorder %s17, 0
      %p85 = por %p83, %p84
      %p86 = scmp.ne.s32.totalorder %s72, %s73
      %p87 = scmp.eq.s32.totalorder %s18, 1
      %p88 = por %p86, %p87
      %p90 = scmp.ne.s32.totalorder %s73, %s89
      %p91 = scmp.eq.s32.totalorder %s18, 0
      %p92 = por %p90, %p91
      %s93 = ssub.s32 %s12, %s19
      %p94 = scmp.eq.s32.totalorder %s93, 0
      %s96 = sadd.s32 %s95, 1
      %s97 = scalar_select %p94, %s95, %s96
      %p100 = pneg %p94
      %p101 = scmp.eq.s32.totalorder %s12, 1
      %p102 = por %p100, %p101
      %p103 = scmp.ne.s32.totalorder %s95, %s98
      %p104 = scmp.eq.s32.totalorder %s12, 0
      %p105 = por %p103, %p104
      %p106 = scmp.ne.s32.totalorder %s95, %s98
      %p107 = scmp.eq.s32.totalorder %s17, 1
      %p108 = por %p106, %p107
      %p109 = scmp.ne.s32.totalorder %s98, %s99
      %p110 = scmp.eq.s32.totalorder %s17, 0
      %p111 = por %p109, %p110
      %p112 = scmp.ne.s32.totalorder %s98, %s99
      %p113 = scmp.eq.s32.totalorder %s18, 1
      %p114 = por %p112, %p113
      %p116 = scmp.ne.s32.totalorder %s99, %s115
      %p117 = scmp.eq.s32.totalorder %s18, 0
      %p118 = por %p116, %p117
      %s119 = ssub.s32 %s12, %s19
      %p120 = scmp.eq.s32.totalorder %s119, 0
      %s122 = sadd.s32 %s121, 1
      %s123 = scalar_select %p120, %s121, %s122
      %p126 = pneg %p120
      %p127 = scmp.eq.s32.totalorder %s12, 1
      %p128 = por %p126, %p127
      %p129 = scmp.ne.s32.totalorder %s121, %s124
      %p130 = scmp.eq.s32.totalorder %s12, 0
      %p131 = por %p129, %p130
      %p132 = scmp.ne.s32.totalorder %s121, %s124
      %p133 = scmp.eq.s32.totalorder %s17, 1
      %p134 = por %p132, %p133
      %p135 = scmp.ne.s32.totalorder %s124, %s125
      %p136 = scmp.eq.s32.totalorder %s17, 0
      %p137 = por %p135, %p136
      %p138 = scmp.ne.s32.totalorder %s124, %s125
      %p139 = scmp.eq.s32.totalorder %s18, 1
      %p140 = por %p138, %p139
      %p142 = scmp.ne.s32.totalorder %s125, %s141
      %p143 = scmp.eq.s32.totalorder %s18, 0
      %p144 = por %p142, %p143
      %s145 = ssub.s32 %s12, %s19
      %p146 = scmp.eq.s32.totalorder %s145, 0
      %s148 = sadd.s32 %s147, 1
      %s149 = scalar_select %p146, %s147, %s148
      %p152 = pneg %p146
      %p153 = scmp.eq.s32.totalorder %s12, 1
      %p154 = por %p152, %p153
      %p155 = scmp.ne.s32.totalorder %s147, %s150
      %p156 = scmp.eq.s32.totalorder %s12, 0
      %p157 = por %p155, %p156
      %p158 = scmp.ne.s32.totalorder %s147, %s150
      %p159 = scmp.eq.s32.totalorder %s17, 1
      %p160 = por %p158, %p159
      %p161 = scmp.ne.s32.totalorder %s150, %s151
      %p162 = scmp.eq.s32.totalorder %s17, 0
      %p163 = por %p161, %p162
      %p164 = scmp.ne.s32.totalorder %s150, %s151
      %p165 = scmp.eq.s32.totalorder %s18, 1
      %p166 = por %p164, %p165
      %p168 = scmp.ne.s32.totalorder %s151, %s167
      %p169 = scmp.eq.s32.totalorder %s18, 0
      %p170 = por %p168, %p169
      %p171 = scmp.le.s32.totalorder 1, %s12
      %p172 = scmp.lt.s32.totalorder %s12, 3
      %p173 = pnand %p171, %p172
      %p174 = pneg %p173
      // Predicated region
      $region9: #{conv_bn_forward.5} parent=5 // pred_check
        _
      $region10: #{conv_bn_forward.5} parent=5 // pred_check_branch
        %176 = sbr.rel (%p173) target = $region12
      $region11: #{conv_bn_forward.5} parent=5 // pred_region
        %s177 = ssub.s32 %s12, 1
        // Predicated region
        $region13: #{conv_bn_forward.5} parent=11 // pred_check
          %p178 = pneg %p33
        $region14: #{conv_bn_forward.5} parent=11 // pred_check_branch
          %180 = sbr.rel (%p178) target = $region16
        $region15: #{conv_bn_forward.5} parent=11 // pred_region
          _
        $region16: #{conv_bn_forward.5} parent=11 // pred_fallthru
          _
      $region12: #{conv_bn_forward.5} parent=5 // pred_fallthru
        _
      %p181 = scmp.lt.s32.totalorder %s12, 2
      // Predicated region
      $region17: #{conv_bn_forward.5} parent=5 // pred_check
        %p182 = pneg %p181
      $region18: #{conv_bn_forward.5} parent=5 // pred_check_branch
        %184 = sbr.rel (%p182) target = $region20
      $region19: #{conv_bn_forward.5} parent=5 // pred_region
        // Predicated region
        $region21: #{conv_bn_forward.5} parent=19 // pred_check
          %p185 = pneg %p53
        $region22: #{conv_bn_forward.5} parent=19 // pred_check_branch
          %187 = sbr.rel (%p185) target = $region24
        $region23: #{conv_bn_forward.5} parent=19 // pred_region
          %s188 = sand.u32 %s43, 1
          %s189 = sand.u32 %s43, 1
          %s190 = smul.addr %s189, 80
          %s191 = scalar_lea.vmem [#allocation2], %s190
          %s192 = smul.u32 2, %s12
          %s193 = smul.addr %s192, 8
          %s194 = scalar_lea.vmem %s1, %s193
          // Predicated region
          $region25: #{conv_bn_forward.5} parent=23 // pred_check
            _
          $region26: #{conv_bn_forward.5} parent=23 // pred_check_branch
            %196 = sbr.rel (0) target = $region28
          $region27: #{conv_bn_forward.5} parent=23 // pred_region
            // Predicated region
            $region29: #{conv_bn_forward.5} parent=27 // pred_check
              _
            $region30: #{conv_bn_forward.5} parent=27 // pred_check_branch
              %198 = sbr.rel (0) target = $region32
            $region31: #{conv_bn_forward.5} parent=27 // pred_region
              loop: start=0, step=1, limit=1
              $region33: #{conv_bn_forward.5} parent=31 // loop_pre_header
                _
              $region34: #{conv_bn_forward.5} parent=31 // loop_header
                %s200 = sphi 0, %s204
                %p201 = scmp.ge.s32.totalorder %s200, 1
                %s205 = sphi %s194, %s194
                %s206 = sphi %s191, %s191
              $region35: #{conv_bn_forward.5} parent=31 // loop_header_branch
                %203 = sbr.rel (%p201) target = $region39
              $region36: #{conv_bn_forward.5} parent=31 // loop_body
                %v207 = vld [vmem:[%s205] sm:$0xff]
                %208 = vst [vmem:[%s206] sm:$0xff] %v207
                %v209 = vld [vmem:[%s205 + $0x8] sm:$0xff]
                %210 = vst [vmem:[%s206 + $0x8] sm:$0xff] %v209
                %v211 = vld [vmem:[%s205 + $0x20] sm:$0xff]
                %212 = vst [vmem:[%s206 + $0x10] sm:$0xff] %v211
                %v213 = vld [vmem:[%s205 + $0x28] sm:$0xff]
                %214 = vst [vmem:[%s206 + $0x18] sm:$0xff] %v213
                %v215 = vld [vmem:[%s205 + $0x40] sm:$0xff]
                %216 = vst [vmem:[%s206 + $0x20] sm:$0xff] %v215
                %v217 = vld [vmem:[%s205 + $0x48] sm:$0xff]
                %218 = vst [vmem:[%s206 + $0x28] sm:$0xff] %v217
                %v219 = vld [vmem:[%s205 + $0x60] sm:$0xff]
                %220 = vst [vmem:[%s206 + $0x30] sm:$0xff] %v219
                %v221 = vld [vmem:[%s205 + $0x68] sm:$0xff]
                %222 = vst [vmem:[%s206 + $0x38] sm:$0xff] %v221
                %v223 = vld [vmem:[%s205 + $0x80] sm:$0xff]
                %224 = vst [vmem:[%s206 + $0x40] sm:$0xff] %v223
                %v225 = vld [vmem:[%s205 + $0x88] sm:$0xff]
                %226 = vst [vmem:[%s206 + $0x48] sm:$0xff] %v225
              $region37: #{conv_bn_forward.5} parent=31 // loop_footer
                %s204 = sadd.s32 1, %s200
              $region38: #{conv_bn_forward.5} parent=31 // loop_footer_branch
                %199 = sbr.rel target = $region34
              $region39: #{conv_bn_forward.5} parent=31 // loop_exit
                _
            $region32: #{conv_bn_forward.5} parent=27 // pred_fallthru
              _
            // Predicated region
            $region40: #{conv_bn_forward.5} parent=27 // pred_check
              _
            $region41: #{conv_bn_forward.5} parent=27 // pred_check_branch
              %228 = sbr.rel target = $region43
            $region42: #{conv_bn_forward.5} parent=27 // pred_region
              _
            $region43: #{conv_bn_forward.5} parent=27 // pred_fallthru
              _
          $region28: #{conv_bn_forward.5} parent=23 // pred_fallthru
            _
          %229 = vnop
        $region24: #{conv_bn_forward.5} parent=19 // pred_fallthru
          _
        // Predicated region
        $region44: #{conv_bn_forward.5} parent=19 // pred_check
          %p230 = pneg %p79
        $region45: #{conv_bn_forward.5} parent=19 // pred_check_branch
          %232 = sbr.rel (%p230) target = $region47
        $region46: #{conv_bn_forward.5} parent=19 // pred_region
          %s233 = smul.u32 2, %s12
          %p234 = scmp.lt.s32.totalorder %s233, 3
          %s235 = scalar_select %p234, %s233, 3
          %s236 = smul.addr %s235, 4
          %s237 = scalar_lea.vmem %s2, %s236
          %s238 = smul.u32 2, %s12
        $region47: #{conv_bn_forward.5} parent=19 // pred_fallthru
          _
      $region20: #{conv_bn_forward.5} parent=5 // pred_fallthru
        _
      %p239 = scmp.le.s32.totalorder 1, %s12
      %p240 = scmp.lt.s32.totalorder %s12, 3
      %p241 = pnand %p239, %p240
      %p242 = pneg %p241
      // Predicated region
      $region48: #{conv_bn_forward.5} parent=5 // pred_check
        _
      $region49: #{conv_bn_forward.5} parent=5 // pred_check_branch
        %244 = sbr.rel (%p241) target = $region51
      $region50: #{conv_bn_forward.5} parent=5 // pred_region
        %s245 = ssub.s32 %s12, 1
        %s246 = sand.u32 %s46, 1
        %s247 = sand.u32 %s46, 1
        %s248 = smul.addr %s247, 80
        %s249 = scalar_lea.vmem [#allocation2], %s248
        // Predicated region
        $region52: #{conv_bn_forward.5} parent=50 // pred_check
          %p250 = pneg %p59
        $region53: #{conv_bn_forward.5} parent=50 // pred_check_branch
          %252 = sbr.rel (%p250) target = $region55
        $region54: #{conv_bn_forward.5} parent=50 // pred_region
          _
        $region55: #{conv_bn_forward.5} parent=50 // pred_fallthru
          _
        %p253 = pneg %p33
        %p254 = pneg %p30
        %s255 = sand.u32 %s46, 1
        %s256 = sand.u32 %s46, 1
        %s257 = smul.addr %s256, 80
        %s258 = scalar_lea.vmem [#allocation2], %s257
        %p259 = pneg %p59
        %p260 = pneg %p56
        %s261 = smul.u32 2, %s17
        %p262 = scmp.lt.s32.totalorder %s261, 3
        %s263 = scalar_select %p262, %s261, 3
        %s264 = smul.addr %s263, 4
        %s265 = scalar_lea.vmem %s2, %s264
        %p266 = pneg %p85
        %p267 = pneg %p82
        %p268 = pneg %p111
        %p269 = pneg %p108
        %s270 = smul.u32 2, %s17
        %p271 = scmp.lt.s32.totalorder %s270, 3
        %s272 = scalar_select %p271, %s270, 3
        %s273 = smul.addr %s272, 4
        %s274 = scalar_lea.vmem %s3, %s273
        %p275 = pneg %p137
        %p276 = pneg %p134
        %p277 = scmp.lt.s32.totalorder %s17, 1
        %s278 = scalar_select %p277, %s17, 1
        %s279 = smul.addr %s278, 4
        %s280 = scalar_lea.vmem %s4, %s279
        %p281 = pneg %p163
        %p282 = pneg %p160
        %p283 = scmp.lt.s32.totalorder %s17, 1
        %s284 = scalar_select %p283, %s17, 1
        %s285 = smul.addr %s284, 4
        %s286 = scalar_lea.vmem %s5, %s285
        %s287 = smul.u32 2, %s17
        %s288 = smul.u32 2, %s17
        %p289 = scmp.lt.s32.totalorder %s288, 3
        %s290 = scalar_select %p289, %s288, 3
        %s291 = smul.addr %s290, 4
        %s292 = scalar_lea.vmem %s2, %s291
        %s293 = smul.u32 2, %s17
        %s294 = smul.u32 2, %s17
        %p295 = scmp.lt.s32.totalorder %s294, 3
        %s296 = scalar_select %p295, %s294, 3
        %s297 = smul.addr %s296, 4
        %s298 = scalar_lea.vmem %s3, %s297
        %s299 = smul.u32 2, %s17
        %p300 = scmp.lt.s32.totalorder %s17, 1
        %s301 = scalar_select %p300, %s17, 1
        %s302 = smul.addr %s301, 4
        %s303 = scalar_lea.vmem %s4, %s302
        %p304 = scmp.lt.s32.totalorder %s17, 1
        %s305 = scalar_select %p304, %s17, 1
        %s306 = smul.addr %s305, 4
        %s307 = scalar_lea.vmem %s5, %s306
        %v308 = vld [vmem:[%s0] sm:$0xf]
        %v309 = vld [vmem:[%s249] sm:$0xff]
        %v310 = vld [vmem:[%s249 + $0x8] sm:$0xff]
        %v311 = vld [vmem:[%s249 + $0x10] sm:$0xff]
        %v312 = vld [vmem:[%s249 + $0x18] sm:$0xff]
        %v313 = vld [vmem:[%s249 + $0x20] sm:$0xff]
        %v314 = vld [vmem:[%s249 + $0x28] sm:$0xff]
        %v315 = vld [vmem:[%s249 + $0x30] sm:$0xff]
        %v316 = vld [vmem:[%s249 + $0x38] sm:$0xff]
        %v317 = vld [vmem:[%s249 + $0x40] sm:$0xf]
        %v318 = vld [vmem:[%s249 + $0x48] sm:$0xf]
        %v319 = vld [vmem:[%s292] sm:$0xff]
        %v321 = vcombine.high %v319, %v319
        %vm323 = vcmask 293888
        %v325 = vsel %vm323, %v308, 0
        %vm327 = vcmask 1043456
        %v329 = vsel %vm327, %v317, 0
        %v332 = vsel %vm327, %v318, 0
        %334 = vmatprep.subr.mxu0 %v310
        %335 = vmatpush1.msra.mxu0 %v309
        %336 = vmatprep.subr.mxu0 %v312
        %337 = vmatpush1.msra.mxu0 %v311
        %338 = vmatprep.subr.mxu0 %v314
        %339 = vmatpush1.msra.mxu0 %v313
        %340 = vmatprep.subr.mxu0 %v316
        %341 = vmatpush1.msra.mxu0 %v315
        %342 = vmatprep.subr.mxu0 %v332
        %343 = vmatpush1.msra.mxu0 %v329
        %344 = vmatprep.subr.mxu0 0.0
        %345 = vmatpush1.msra.mxu0 0.0
        %346 = vmatprep.subr.mxu0 0.0
        %347 = vmatpush1.msra.mxu0 0.0
        %348 = vmatprep.subr.mxu0 0.0
        %349 = vmatpush1.msra.mxu0 0.0
        %350 = vmatprep.subr.mxu0 0.0
        %351 = vmatpush1.msra.mxu0 0.0
        %352 = vmatprep.subr.mxu0 0.0
        %353 = vmatpush1.msra.mxu0 0.0
        %354 = vmatprep.subr.mxu0 0.0
        %355 = vmatpush1.msra.mxu0 0.0
        %356 = vmatprep.subr.mxu0 0.0
        %357 = vmatpush1.msra.mxu0 0.0
        %358 = vmatprep.subr.mxu0 0.0
        %359 = vmatpush1.msra.mxu0 0.0
        %360 = vmatprep.subr.mxu0 0.0
        %361 = vmatpush1.msra.mxu0 0.0
        %362 = vmatprep.subr.mxu0 0.0
        %363 = vmatpush1.msra.mxu0 0.0
        %364 = vmatprep.subr.mxu0 0.0
        %365 = vmatpush1.msra.mxu0 0.0
        %366 = vmatprep.subr.mxu0 0.0
        %367 = vmatpush1.msra.mxu0 0.0
        %368 = vmatprep.subr.mxu0 0.0
        %369 = vmatpush1.msra.mxu0 0.0
        %370 = vmatprep.subr.mxu0 0.0
        %371 = vmatpush1.msra.mxu0 0.0
        %372 = vmatprep.subr.mxu0 0.0
        %373 = vmatpush1.msra.mxu0 0.0
        %374 = vmatprep.subr.mxu0 0.0
        %375 = vmatpush1.msra.mxu0 0.0
        %376 = vmatprep.subr.mxu0 0.0
        %377 = vmatpush1.msra.mxu0 0.0
        %378 = vmatprep.subr.mxu0 0.0
        %379 = vmatpush1.msra.mxu0 0.0
        %380 = vmatprep.subr.mxu0 0.0
        %381 = vmatpush1.msra.mxu0 0.0
        %382 = vmatprep.subr.mxu0 0.0
        %383 = vmatpush1.msra.mxu0 0.0
        %384 = vmatprep.subr.mxu0 0.0
        %385 = vmatpush1.msra.mxu0 0.0
        %386 = vmatprep.subr.mxu0 0.0
        %387 = vmatpush1.msra.mxu0 0.0
        %388 = vmatprep.subr.mxu0 0.0
        %389 = vmatpush1.msra.mxu0 0.0
        %390 = vmatprep.subr.mxu0 0.0
        %391 = vmatpush1.msra.mxu0 0.0
        %392 = vmatprep.subr.mxu0 0.0
        %393 = vmatpush1.msra.mxu0 0.0
        %394 = vmatprep.subr.mxu0 0.0
        %395 = vmatpush1.msra.mxu0 0.0
        %396 = vmatprep.subr.mxu0 0.0
        %397 = vmatpush1.msra.mxu0 0.0
        %398 = vmatprep.mubr.f32.mxu0 0.0
        %399 = vmatmul.mubr.f32.gmra.mrb[0].mxu0 %v325
        %v400 = vpop.f32.mrb[0].mxu0
        %v401 = vadd.f32 %v319, %v400
        %v402 = vpop.f32.mrb[0].mxu0
        %v403 = vadd.f32 %v321, %v402
        %404 = vdwg.mxu0
        %v407 = vcombine.low %v401, %v403
        %409 = vst [vmem:[%s298] sm:$0xff] %v407
        %v410 = vsel %vm327, %v401, 0.0
        %v411 = vsel %vm327, %v403, 0.0
        %v412 = vadd.f32 %v410, %v411
        %413 = vadd.xlane.f32.xlu0 %v412
        %v414 = vpop.xlane.xlu0 %413
        %vm415 = vcmask 3072
        %416 = vst.msk [vmem:[%s303] sm:$0xf] %vm415, %v414
        %v417 = vmul.f32 %v401, %v401
        %v418 = vmul.f32 %v403, %v403
        %v419 = vsel %vm327, %v417, 0.0
        %v420 = vsel %vm327, %v418, 0.0
        %v421 = vadd.f32 %v419, %v420
        %422 = vadd.xlane.f32.xlu0 %v421
        %v423 = vpop.xlane.xlu0 %422
        %424 = vst.msk [vmem:[%s307] sm:$0xf] %vm415, %v423
        %s425 = smul.u32 2, %s17
        %p426 = scmp.lt.s32.totalorder %s425, 3
        %s427 = scalar_select %p426, %s425, 3
        %s428 = smul.addr %s427, 4
        %s429 = scalar_lea.vmem %s3, %s428
        %p430 = scmp.lt.s32.totalorder %s17, 1
        %s431 = scalar_select %p430, %s17, 1
        %s432 = smul.addr %s431, 4
        %s433 = scalar_lea.vmem %s4, %s432
        %p434 = scmp.lt.s32.totalorder %s17, 1
        %s435 = scalar_select %p434, %s17, 1
        %s436 = smul.addr %s435, 4
        %s437 = scalar_lea.vmem %s5, %s436
        // Predicated region
        $region56: #{conv_bn_forward.5} parent=50 // pred_check
          %p438 = pneg %p108
        $region57: #{conv_bn_forward.5} parent=50 // pred_check_branch
          %440 = sbr.rel (%p438) target = $region59
        $region58: #{conv_bn_forward.5} parent=50 // pred_region
          %s441 = smul.u32 2, %s17
        $region59: #{conv_bn_forward.5} parent=50 // pred_fallthru
          _
        // Predicated region
        $region60: #{conv_bn_forward.5} parent=50 // pred_check
          %p442 = pneg %p134
        $region61: #{conv_bn_forward.5} parent=50 // pred_check_branch
          %444 = sbr.rel (%p442) target = $region63
        $region62: #{conv_bn_forward.5} parent=50 // pred_region
          _
        $region63: #{conv_bn_forward.5} parent=50 // pred_fallthru
          _
        // Predicated region
        $region64: #{conv_bn_forward.5} parent=50 // pred_check
          %p445 = pneg %p160
        $region65: #{conv_bn_forward.5} parent=50 // pred_check_branch
          %447 = sbr.rel (%p445) target = $region67
        $region66: #{conv_bn_forward.5} parent=50 // pred_region
          _
        $region67: #{conv_bn_forward.5} parent=50 // pred_fallthru
          _
      $region51: #{conv_bn_forward.5} parent=5 // pred_fallthru
        _
      %p448 = scmp.le.s32.totalorder 2, %s12
      // Predicated region
      $region68: #{conv_bn_forward.5} parent=5 // pred_check
        %p449 = pneg %p448
      $region69: #{conv_bn_forward.5} parent=5 // pred_check_branch
        %451 = sbr.rel (%p449) target = $region71
      $region70: #{conv_bn_forward.5} parent=5 // pred_region
        %s452 = ssub.s32 %s12, 2
        // Predicated region
        $region72: #{conv_bn_forward.5} parent=70 // pred_check
          %p453 = pneg %p114
        $region73: #{conv_bn_forward.5} parent=70 // pred_check_branch
          %455 = sbr.rel (%p453) target = $region75
        $region74: #{conv_bn_forward.5} parent=70 // pred_region
          %s456 = smul.u32 2, %s18
          %p457 = scmp.lt.s32.totalorder %s456, 3
          %s458 = scalar_select %p457, %s456, 3
          %s459 = smul.addr %s458, 4
          %s460 = scalar_lea.vmem %s3, %s459
        $region75: #{conv_bn_forward.5} parent=70 // pred_fallthru
          _
        // Predicated region
        $region76: #{conv_bn_forward.5} parent=70 // pred_check
          %p461 = pneg %p140
        $region77: #{conv_bn_forward.5} parent=70 // pred_check_branch
          %463 = sbr.rel (%p461) target = $region79
        $region78: #{conv_bn_forward.5} parent=70 // pred_region
          %p464 = scmp.lt.s32.totalorder %s18, 1
          %s465 = scalar_select %p464, %s18, 1
          %s466 = smul.addr %s465, 4
          %s467 = scalar_lea.vmem %s4, %s466
        $region79: #{conv_bn_forward.5} parent=70 // pred_fallthru
          _
        // Predicated region
        $region80: #{conv_bn_forward.5} parent=70 // pred_check
          %p468 = pneg %p166
        $region81: #{conv_bn_forward.5} parent=70 // pred_check_branch
          %470 = sbr.rel (%p468) target = $region83
        $region82: #{conv_bn_forward.5} parent=70 // pred_region
          %p471 = scmp.lt.s32.totalorder %s18, 1
          %s472 = scalar_select %p471, %s18, 1
          %s473 = smul.addr %s472, 4
          %s474 = scalar_lea.vmem %s5, %s473
        $region83: #{conv_bn_forward.5} parent=70 // pred_fallthru
          _
      $region71: #{conv_bn_forward.5} parent=5 // pred_fallthru
        _
    $region6: #{conv_bn_forward.5} parent=1 // loop_footer
      %s16 = sadd.s32 1, %s12
    $region7: #{conv_bn_forward.5} parent=1 // loop_footer_branch
      %11 = sbr.rel target = $region3
    $region8: #{conv_bn_forward.5} parent=1 // loop_exit
      _

</llo_original>
